<compile_context>
chip_gen: v6e
topology: v6e:2x2x1
jax: 0.10.0
libtpu: 0.0.40
codegen_flags: <defaults>
</compile_context>

<pallas_src>
import math
import numpy as np
import jax
import jax.numpy as jnp
from jax.experimental import pallas as pl
from jax.experimental.pallas import tpu as pltpu

# ----------------------------- module hyper-parameters ---------------------------------
N_FEATURES = 4                    # n_features
NUM_CHANNEL = [32, 32, 40]
KSIZE = 4                         # Conv1d kernel_size (stride = 1)
B = 2                             # batch
L_SEQ = 160                       # sequence length l
SCALE1, SCALE2, SCALE3 = 64, 128, 256
POOL_OUT = 64                     # AdaptiveMaxPool1d(64)
INIT_ALPHA = 1.0

C_IN = N_FEATURES
C1 = NUM_CHANNEL[1]               # conv0 out channels (32)
C2 = NUM_CHANNEL[2]               # conv1 out channels (40)
CPAD = 8                          # C_IN padded to a full sublane tile

NGROUP = 4 * B                    # (scale, batch) groups processed jointly: 8
GSTRIDE = POOL_OUT                # per-group column stride, kept padded at 64 throughout
NCOL = NGROUP * GSTRIDE           # 512 working columns
NBL = B * L_SEQ                   # 320 pooling-slab columns (batch along lanes)

# per-group valid lengths on the (never compacted) stride-1 column grid
L1 = POOL_OUT - KSIZE + 1         # after conv0            : 61
P1 = L1 // 2                      # after MaxPool1d(2)     : 30
L2 = P1 - KSIZE + 1               # after conv1            : 27
P2 = L2 // 2                      # after MaxPool1d(2)     : 13

# deepest conv0 column any used output depends on must stay inside its 64-wide group
_MAX_COL_USED = 4 * (P2 - 1) + 2 + 2 * (KSIZE - 1) + 1
assert _MAX_COL_USED <= L1 - 1 and L1 <= GSTRIDE

# --------------------- packed parameter-slab layout (f32, (80, 128)) -------------------
# rows 0:40  -> w2m (C2, KSIZE*C1) im2col conv1 weight
# rows 40:80 -> "small parameter" slab, column layout below
PROW = C2
PCOL_WFC1 = 0                      # (C2, C2)           cols   0: 40
PCOL_WFC2 = PCOL_WFC1 + C2         # (N_FEATURES, C2)   cols  40: 80
PCOL_W1 = PCOL_WFC2 + C2           # (C1, KSIZE*CPAD)   cols  80:112
PCOL_B1 = PCOL_W1 + KSIZE * CPAD   # (C1, 1)            col  112
PCOL_B2 = PCOL_B1 + 1              # (C2, 1)            col  113
PCOL_BFC1 = PCOL_B2 + 1            # (C2, 1)            col  114
PCOL_BFC2 = PCOL_BFC1 + 1          # (N_FEATURES, 1)    col  115
PCOL_ALPHA = PCOL_BFC2 + 1         # (NGROUP, B)        cols 116:118
assert PCOL_ALPHA + B <= 128


# ------------------------- host-built constant selection matrices ----------------------
def _adaptive_pool_starts(l_in, n_out):
    """PyTorch AdaptiveMaxPool1d bins [floor(j*l/n), ceil((j+1)*l/n)); require uniform width."""
    starts = [(j * l_in) // n_out for j in range(n_out)]
    ends = [-(-((j + 1) * l_in) // n_out) for j in range(n_out)]
    widths = {e - s for s, e in zip(starts, ends)}
    # TODO(synk): non-uniform adaptive-pool bins would need a masked-max path instead.
    assert len(widths) == 1, "adaptive pool bins are not uniform for this length"
    return starts, widths.pop()


def _pool_select(offset, starts, seg_len, n_batch, n_out):
    """Window-max -> pooled columns as a 0/1 select matmul (batch-block-diagonal)."""
    s = np.zeros((n_batch * seg_len, n_batch * n_out), np.float32)
    for bi in range(n_batch):
        for j, st in enumerate(starts):
            s[bi * seg_len + offset + st, bi * n_out + j] = 1.0
    return s


def _final_select():
    """MaxPool1d(2) + AdaptiveAvgPool1d(1) on the stride-1 grid: mean of rm[4u], u < P2."""
    s = np.zeros((NCOL, NGROUP), np.float32)
    for g in range(NGROUP):
        for u in range(P2):
            s[g * GSTRIDE + 4 * u, g] = 1.0 / P2
    return s


# ------------------------------------ forward ------------------------------------------
def cnn_feature_extractor_forward(x, params):
    """Fused Pallas implementation of CNNFeatureExtractor.forward (inference)."""
    b, l, c = x.shape
    assert (b, l, c) == (B, L_SEQ, C_IN)
    # regime supported here: scale1 unpooled, scales 2 & 3 both pool the full sequence
    assert SCALE1 == POOL_OUT and SCALE2 <= l <= SCALE3  # TODO(synk): other l regimes need new select matrices

    ls1 = min(SCALE2, l)
    starts1, w1w = _adaptive_pool_starts(ls1, POOL_OUT)
    startsf, wfw = _adaptive_pool_starts(l, POOL_OUT)
    max_w = max(w1w, wfw)
    assert (l - ls1) + starts1[-1] + w1w <= l and startsf[-1] + wfw <= l

    # the two adaptive-pool select matrices as ONE bf16 operand (0/1 exact in bf16)
    selpool = jnp.asarray(
        np.concatenate([_pool_select(l - ls1, starts1, l, B, POOL_OUT),
                        _pool_select(0, startsf, l, B, POOL_OUT)], axis=1),
        dtype=jnp.bfloat16)                                             # (320, 256)
    msel2 = jnp.asarray(_final_select())                                # (512, 8) f32

    # host layout glue (cheap XLA ops; fused / constant-folded under jit)
    x_slab = jnp.transpose(x, (2, 0, 1)).reshape(C_IN, B * l)           # batch along lanes
    x_slab = jnp.pad(x_slab, ((0, CPAD - C_IN), (0, 0)))                # (8, 320)

    w2m = jnp.transpose(params["w2"], (0, 2, 1)).reshape(C2, KSIZE * C1)           # (40, 128)
    w1p = jnp.pad(jnp.transpose(params["w1"], (0, 2, 1)),
                  ((0, 0), (0, 0), (0, CPAD - C_IN))).reshape(C1, KSIZE * CPAD)    # (32, 32)
    wfc1s = params["wfc1"][:, :C2] + params["wfc1"][:, C2:]             # fold concat([avg, avg])
    alpham = (params["alphas"][:, None, None]
              * jnp.eye(B, dtype=jnp.float32)[None]).reshape(NGROUP, B)

    pslab = jnp.zeros((C2, 128), jnp.float32)
    pslab = pslab.at[:, PCOL_WFC1:PCOL_WFC1 + C2].set(wfc1s)
    pslab = pslab.at[:N_FEATURES, PCOL_WFC2:PCOL_WFC2 + C2].set(params["wfc2"])
    pslab = pslab.at[:C1, PCOL_W1:PCOL_W1 + KSIZE * CPAD].set(w1p)
    pslab = pslab.at[:C1, PCOL_B1].set(params["b1"])
    pslab = pslab.at[:C2, PCOL_B2].set(params["b2"])
    pslab = pslab.at[:C2, PCOL_BFC1].set(params["bfc1"])
    pslab = pslab.at[:N_FEATURES, PCOL_BFC2].set(params["bfc2"])
    pslab = pslab.at[:NGROUP, PCOL_ALPHA:PCOL_ALPHA + B].set(alpham)
    prm_packed = jnp.concatenate([w2m, pslab], axis=0)                  # (80, 128): one DMA

    def kernel(x_ref, prm_ref, selpool_ref, msel2_ref, out_ref):
        def shl(a, k):
            """Whole-slab left shift along lanes with zero fill (no per-group slicing)."""
            if k == 0:
                return a
            return jnp.concatenate(
                [a[:, k:], jnp.zeros((a.shape[0], k), a.dtype)], axis=1)

        slab = x_ref[...]                                               # (8, B*l)
        par = prm_ref[...]                                              # (80, 128)

        # ---- adaptive max pools, batch along lanes: one window-max chain + one select
        #      matmul per distinct scale; scale 0 is an unpooled copy of the last 64
        wmax = {1: slab}
        for w in range(2, max_w + 1):
            wmax[w] = jnp.maximum(wmax[w - 1], shl(slab, w - 1))
        sel = selpool_ref[...].astype(jnp.float32)                      # bf16 0/1 -> f32 exact
        p1 = jnp.dot(wmax[w1w], sel[:, :B * POOL_OUT],
                     preferred_element_type=jnp.float32)                # (8, 128) scale 1
        pf = jnp.dot(wmax[wfw], sel[:, B * POOL_OUT:],
                     preferred_element_type=jnp.float32)                # (8, 128) scales 2 & 3
        p0 = jnp.concatenate(
            [slab[:, bi * l + l - POOL_OUT:(bi + 1) * l] for bi in range(B)],
            axis=1)                                                     # (8, 128) scale 0
        x0 = jnp.concatenate([p0, p1, pf, pf], axis=1)                  # (8, 512), group g = s*B + b

        # ---- conv0 + bias + relu: KSIZE accumulating (C1, 8) x (8, 512) matmuls
        acc = jnp.dot(par[PROW:PROW + C1, PCOL_W1:PCOL_W1 + CPAD], x0,
                      preferred_element_type=jnp.float32)
        for k in range(1, KSIZE):
            wk = par[PROW:PROW + C1, PCOL_W1 + k * CPAD:PCOL_W1 + (k + 1) * CPAD]
            acc = acc + jnp.dot(wk, shl(x0, k), preferred_element_type=jnp.float32)
        h0 = jnp.maximum(acc + par[PROW:PROW + C1, PCOL_B1:PCOL_B1 + 1], 0.0)   # (C1, 512)

        # ---- MaxPool1d(2) kept on the stride-1 grid: pooled value u lives at column 2u
        pm = jnp.maximum(h0, shl(h0, 1))                                # pm[v] = max(h0[v], h0[v+1])

        # ---- conv1 + bias + relu: single (C2, 128) x (128, 512) MXU matmul
        a1 = jnp.concatenate([shl(pm, 2 * k) for k in range(KSIZE)], axis=0)    # (128, 512)
        h1 = jnp.maximum(
            jnp.dot(par[:C2, :], a1, preferred_element_type=jnp.float32)
            + par[PROW:PROW + C2, PCOL_B2:PCOL_B2 + 1], 0.0)            # (C2, 512); col 2t = conv1[t]

        # ---- MaxPool1d(2) + AdaptiveAvgPool1d(1): mean over u of max(h1[4u], h1[4u+2])
        rm = jnp.maximum(h1, shl(h1, 2))
        m = jnp.dot(rm, msel2_ref[...], preferred_element_type=jnp.float32)     # (C2, NGROUP)

        # ---- FC head (AdaptiveConcatPool's identical avg branches folded into wfc1)
        f1 = jnp.maximum(
            jnp.dot(par[PROW:PROW + C2, PCOL_WFC1:PCOL_WFC1 + C2], m,
                    preferred_element_type=jnp.float32)
            + par[PROW:PROW + C2, PCOL_BFC1:PCOL_BFC1 + 1], 0.0)
        # Dropout(dropout_rate): identity at inference time
        f2 = (jnp.dot(par[PROW:PROW + N_FEATURES, PCOL_WFC2:PCOL_WFC2 + C2], f1,
                      preferred_element_type=jnp.float32)
              + par[PROW:PROW + N_FEATURES, PCOL_BFC2:PCOL_BFC2 + 1])   # (N_FEATURES, NGROUP)

        # ---- alpha-weighted combine over the 4 scales as one tiny matmul; ocd == oci
        out_ref[...] = jnp.dot(
            f2, par[PROW:PROW + NGROUP, PCOL_ALPHA:PCOL_ALPHA + B],
            preferred_element_type=jnp.float32)                         # (N_FEATURES, B)

    oci_t = pl.pallas_call(
        kernel,
        out_shape=jax.ShapeDtypeStruct((N_FEATURES, B), jnp.float32),
        in_specs=[pl.BlockSpec(memory_space=pltpu.MemorySpace.VMEM)] * 4,
        out_specs=pl.BlockSpec(memory_space=pltpu.MemorySpace.VMEM),
    )(x_slab, prm_packed, selpool, msel2)

    oci = oci_t.T                                                       # (B, N_FEATURES)
    x_out = oci[:, None, :]                      # x = sum(alpha_i * x_s_i).unsqueeze(1)
    outputs = oci[None, :, :]                    # ocd = 0*(oci @ G.T) + oci == oci
    return x_out, [], outputs, params["causal_graph"]


# ------------------------------ float64 numpy reference --------------------------------
def ref_forward_np(x, p):
    """Exact (float64, numpy) reference of CNNFeatureExtractor.forward (inference)."""
    x = np.asarray(x, np.float64)
    p = {k: np.asarray(v, np.float64) for k, v in p.items()}
    b, l, c = x.shape
    xt = np.transpose(x, (0, 2, 1))                        # (B, C, L)

    def adaptive_max_pool(z, n_out):
        length = z.shape[-1]
        cols = []
        for j in range(n_out):
            s = (j * length) // n_out
            e = -(-((j + 1) * length) // n_out)
            cols.append(z[..., s:e].max(axis=-1, keepdims=True))
        return np.concatenate(cols, axis=-1)

    def conv1d(z, w, bias):
        k = w.shape[-1]
        lout = z.shape[-1] - k + 1
        out = np.zeros((z.shape[0], w.shape[0], lout), np.float64)
        for t in range(k):
            out += np.einsum('oc,bcl->bol', w[:, :, t], z[:, :, t:t + lout])
        return out + bias[None, :, None]

    def maxpool2(z):
        n = z.shape[-1] // 2
        return z[..., :2 * n].reshape(z.shape[0], z.shape[1], n, 2).max(axis=-1)

    feats = []
    for i, s in enumerate([SCALE1, SCALE2, SCALE3, l]):
        se = min(s, l)                                     # torch's x[:, :, -s:] clamps
        xi = xt[:, :, l - se:]
        if i >= 1:
            xi = adaptive_max_pool(xi, POOL_OUT)
        h = maxpool2(np.maximum(conv1d(xi, p["w1"], p["b1"]), 0.0))
        h = maxpool2(np.maximum(conv1d(h, p["w2"], p["b2"]), 0.0))
        m = h.mean(axis=-1)                                # AdaptiveAvgPool1d(1)
        pooled = np.concatenate([m, m], axis=1)            # both AdaptiveConcatPool branches are avg
        f1 = np.maximum(pooled @ p["wfc1"].T + p["bfc1"], 0.0)
        feats.append(f1 @ p["wfc2"].T + p["bfc2"])         # Dropout = identity (eval)
    oci = sum(p["alphas"][i] * feats[i] for i in range(4))
    ocd = 0.0 * (oci @ p["causal_graph"].T) + oci
    return oci[:, None, :], ocd[None, :, :]


# --------------------------------------- main -------------------------------------------
if __name__ == "__main__":
    key = jax.random.PRNGKey(0)
    ks = jax.random.split(key, 10)

    params = {
        "w1": jax.random.normal(ks[0], (C1, C_IN, KSIZE), jnp.float32) / math.sqrt(C_IN * KSIZE),
        "b1": 0.01 * jax.random.normal(ks[1], (C1,), jnp.float32),
        "w2": jax.random.normal(ks[2], (C2, C1, KSIZE), jnp.float32) / math.sqrt(C1 * KSIZE),
        "b2": 0.01 * jax.random.normal(ks[3], (C2,), jnp.float32),
        "wfc1": jax.random.normal(ks[4], (C2, 2 * C2), jnp.float32) / math.sqrt(2 * C2),
        "bfc1": 0.01 * jax.random.normal(ks[5], (C2,), jnp.float32),
        "wfc2": jax.random.normal(ks[6], (N_FEATURES, C2), jnp.float32) / math.sqrt(C2),
        "bfc2": 0.01 * jax.random.normal(ks[7], (N_FEATURES,), jnp.float32),
        "causal_graph": 0.1 * jax.random.normal(ks[8], (N_FEATURES, N_FEATURES), jnp.float32),
        "alphas": INIT_ALPHA * jnp.ones((4,), jnp.float32),   # alpha1..alpha4
    }
    x = jax.random.normal(ks[9], (B, L_SEQ, N_FEATURES), jnp.float32)

    fwd = jax.jit(cnn_feature_extractor_forward)
    x_out, empty_list, outputs, graph = fwd(x, params)
    jax.block_until_ready((x_out, outputs, graph))

    assert x_out.shape == (B, 1, N_FEATURES)
    assert outputs.shape == (1, B, N_FEATURES)
    assert empty_list == []
    assert graph.shape == (N_FEATURES, N_FEATURES)

    x_ref_np, out_ref_np = ref_forward_np(np.asarray(x),
                                          {k: np.asarray(v) for k, v in params.items()})
    # float64 numpy reference vs. all-f32 Pallas kernel (MXU multi-pass f32 rounding margin)
    np.testing.assert_allclose(np.asarray(x_out), x_ref_np, rtol=2e-4, atol=2e-4)
    np.testing.assert_allclose(np.asarray(outputs), out_ref_np, rtol=2e-4, atol=2e-4)

    print("KERNEL_OK")
</pallas_src>

<mosaic_0001>
module attributes {stable_mosaic.version = 11 : i64} {
  func.func @kernel(%arg0: memref<8x320xf32, #tpu.memory_space<vmem>>, %arg1: memref<80x128xf32, #tpu.memory_space<vmem>>, %arg2: memref<320x256xbf16, #tpu.memory_space<vmem>>, %arg3: memref<512x8xf32, #tpu.memory_space<vmem>>, %arg4: memref<4x2xf32, #tpu.memory_space<vmem>>) attributes {dimension_semantics = [], scalar_prefetch = 0 : i64, scratch_operands = 0 : i64, tpu.core_type = #tpu.core_type<tc>} {
    %c0 = arith.constant 0 : index
    %c0_0 = arith.constant 0 : index
    %0 = vector.load %arg0[%c0, %c0_0] : memref<8x320xf32, #tpu.memory_space<vmem>>, vector<8x320xf32>
    %c0_1 = arith.constant 0 : index
    %c0_2 = arith.constant 0 : index
    %1 = vector.load %arg1[%c0_1, %c0_2] : memref<80x128xf32, #tpu.memory_space<vmem>>, vector<80x128xf32>
    %2 = vector.extract_strided_slice %0 {offsets = [0, 1], sizes = [8, 319], strides = [1, 1]} : vector<8x320xf32> to vector<8x319xf32>
    %cst = arith.constant 0.000000e+00 : f32
    %3 = vector.broadcast %cst : f32 to vector<8x1xf32>
    %4 = tpu.concatenate %2, %3 in 1 : vector<8x319xf32>, vector<8x1xf32> -> vector<8x320xf32>
    %5 = arith.maximumf %0, %4 : vector<8x320xf32>
    %6 = vector.extract_strided_slice %0 {offsets = [0, 2], sizes = [8, 318], strides = [1, 1]} : vector<8x320xf32> to vector<8x318xf32>
    %cst_3 = arith.constant 0.000000e+00 : f32
    %7 = vector.broadcast %cst_3 : f32 to vector<8x2xf32>
    %8 = tpu.concatenate %6, %7 in 1 : vector<8x318xf32>, vector<8x2xf32> -> vector<8x320xf32>
    %9 = arith.maximumf %5, %8 : vector<8x320xf32>
    %c0_4 = arith.constant 0 : index
    %c0_5 = arith.constant 0 : index
    %10 = vector.load %arg2[%c0_4, %c0_5] : memref<320x256xbf16, #tpu.memory_space<vmem>>, vector<320x256xbf16>
    %11 = arith.extf %10 : vector<320x256xbf16> to vector<320x256xf32>
    %12 = vector.extract_strided_slice %11 {offsets = [0, 0], sizes = [320, 128], strides = [1, 1]} : vector<320x256xf32> to vector<320x128xf32>
    %cst_6 = arith.constant dense<0.000000e+00> : vector<8x128xf32>
    %13 = tpu.matmul %5, %12, %cst_6 {dimension_numbers = #tpu.dot_dimension_numbers<[1], [0], [0], [1], [0, 0, 1, 1], [], []>} : vector<8x320xf32>, vector<320x128xf32>, vector<8x128xf32> -> vector<8x128xf32>
    %14 = vector.extract_strided_slice %11 {offsets = [0, 128], sizes = [320, 128], strides = [1, 1]} : vector<320x256xf32> to vector<320x128xf32>
    %cst_7 = arith.constant dense<0.000000e+00> : vector<8x128xf32>
    %15 = tpu.matmul %9, %14, %cst_7 {dimension_numbers = #tpu.dot_dimension_numbers<[1], [0], [0], [1], [0, 0, 1, 1], [], []>} : vector<8x320xf32>, vector<320x128xf32>, vector<8x128xf32> -> vector<8x128xf32>
    %16 = vector.extract_strided_slice %0 {offsets = [0, 96], sizes = [8, 64], strides = [1, 1]} : vector<8x320xf32> to vector<8x64xf32>
    %17 = vector.extract_strided_slice %0 {offsets = [0, 256], sizes = [8, 64], strides = [1, 1]} : vector<8x320xf32> to vector<8x64xf32>
    %18 = tpu.concatenate %16, %17 in 1 : vector<8x64xf32>, vector<8x64xf32> -> vector<8x128xf32>
    %19 = tpu.concatenate %18, %13, %15, %15 in 1 : vector<8x128xf32>, vector<8x128xf32>, vector<8x128xf32>, vector<8x128xf32> -> vector<8x512xf32>
    %20 = vector.extract_strided_slice %1 {offsets = [40, 80], sizes = [32, 8], strides = [1, 1]} : vector<80x128xf32> to vector<32x8xf32>
    %cst_8 = arith.constant dense<0.000000e+00> : vector<32x512xf32>
    %21 = tpu.matmul %20, %19, %cst_8 {dimension_numbers = #tpu.dot_dimension_numbers<[1], [0], [0], [1], [0, 0, 1, 1], [], []>} : vector<32x8xf32>, vector<8x512xf32>, vector<32x512xf32> -> vector<32x512xf32>
    %22 = vector.extract_strided_slice %1 {offsets = [40, 88], sizes = [32, 8], strides = [1, 1]} : vector<80x128xf32> to vector<32x8xf32>
    %23 = vector.extract_strided_slice %19 {offsets = [0, 1], sizes = [8, 511], strides = [1, 1]} : vector<8x512xf32> to vector<8x511xf32>
    %cst_9 = arith.constant 0.000000e+00 : f32
    %24 = vector.broadcast %cst_9 : f32 to vector<8x1xf32>
    %25 = tpu.concatenate %23, %24 in 1 : vector<8x511xf32>, vector<8x1xf32> -> vector<8x512xf32>
    %cst_10 = arith.constant dense<0.000000e+00> : vector<32x512xf32>
    %26 = tpu.matmul %22, %25, %cst_10 {dimension_numbers = #tpu.dot_dimension_numbers<[1], [0], [0], [1], [0, 0, 1, 1], [], []>} : vector<32x8xf32>, vector<8x512xf32>, vector<32x512xf32> -> vector<32x512xf32>
    %27 = arith.addf %21, %26 : vector<32x512xf32>
    %28 = vector.extract_strided_slice %1 {offsets = [40, 96], sizes = [32, 8], strides = [1, 1]} : vector<80x128xf32> to vector<32x8xf32>
    %29 = vector.extract_strided_slice %19 {offsets = [0, 2], sizes = [8, 510], strides = [1, 1]} : vector<8x512xf32> to vector<8x510xf32>
    %cst_11 = arith.constant 0.000000e+00 : f32
    %30 = vector.broadcast %cst_11 : f32 to vector<8x2xf32>
    %31 = tpu.concatenate %29, %30 in 1 : vector<8x510xf32>, vector<8x2xf32> -> vector<8x512xf32>
    %cst_12 = arith.constant dense<0.000000e+00> : vector<32x512xf32>
    %32 = tpu.matmul %28, %31, %cst_12 {dimension_numbers = #tpu.dot_dimension_numbers<[1], [0], [0], [1], [0, 0, 1, 1], [], []>} : vector<32x8xf32>, vector<8x512xf32>, vector<32x512xf32> -> vector<32x512xf32>
    %33 = arith.addf %27, %32 : vector<32x512xf32>
    %34 = vector.extract_strided_slice %1 {offsets = [40, 104], sizes = [32, 8], strides = [1, 1]} : vector<80x128xf32> to vector<32x8xf32>
    %35 = vector.extract_strided_slice %19 {offsets = [0, 3], sizes = [8, 509], strides = [1, 1]} : vector<8x512xf32> to vector<8x509xf32>
    %cst_13 = arith.constant 0.000000e+00 : f32
    %36 = vector.broadcast %cst_13 : f32 to vector<8x3xf32>
    %37 = tpu.concatenate %35, %36 in 1 : vector<8x509xf32>, vector<8x3xf32> -> vector<8x512xf32>
    %cst_14 = arith.constant dense<0.000000e+00> : vector<32x512xf32>
    %38 = tpu.matmul %34, %37, %cst_14 {dimension_numbers = #tpu.dot_dimension_numbers<[1], [0], [0], [1], [0, 0, 1, 1], [], []>} : vector<32x8xf32>, vector<8x512xf32>, vector<32x512xf32> -> vector<32x512xf32>
    %39 = arith.addf %33, %38 : vector<32x512xf32>
    %40 = vector.extract_strided_slice %1 {offsets = [40, 112], sizes = [32, 1], strides = [1, 1]} : vector<80x128xf32> to vector<32x1xf32>
    %41 = vector.broadcast %40 : vector<32x1xf32> to vector<32x512xf32>
    %42 = arith.addf %39, %41 : vector<32x512xf32>
    %cst_15 = arith.constant 0.000000e+00 : f32
    %43 = vector.broadcast %cst_15 : f32 to vector<32x512xf32>
    %44 = arith.maximumf %42, %43 : vector<32x512xf32>
    %45 = vector.extract_strided_slice %44 {offsets = [0, 1], sizes = [32, 511], strides = [1, 1]} : vector<32x512xf32> to vector<32x511xf32>
    %cst_16 = arith.constant 0.000000e+00 : f32
    %46 = vector.broadcast %cst_16 : f32 to vector<32x1xf32>
    %47 = tpu.concatenate %45, %46 in 1 : vector<32x511xf32>, vector<32x1xf32> -> vector<32x512xf32>
    %48 = arith.maximumf %44, %47 : vector<32x512xf32>
    %49 = vector.extract_strided_slice %48 {offsets = [0, 2], sizes = [32, 510], strides = [1, 1]} : vector<32x512xf32> to vector<32x510xf32>
    %cst_17 = arith.constant 0.000000e+00 : f32
    %50 = vector.broadcast %cst_17 : f32 to vector<32x2xf32>
    %51 = tpu.concatenate %49, %50 in 1 : vector<32x510xf32>, vector<32x2xf32> -> vector<32x512xf32>
    %52 = vector.extract_strided_slice %48 {offsets = [0, 4], sizes = [32, 508], strides = [1, 1]} : vector<32x512xf32> to vector<32x508xf32>
    %cst_18 = arith.constant 0.000000e+00 : f32
    %53 = vector.broadcast %cst_18 : f32 to vector<32x4xf32>
    %54 = tpu.concatenate %52, %53 in 1 : vector<32x508xf32>, vector<32x4xf32> -> vector<32x512xf32>
    %55 = vector.extract_strided_slice %48 {offsets = [0, 6], sizes = [32, 506], strides = [1, 1]} : vector<32x512xf32> to vector<32x506xf32>
    %cst_19 = arith.constant 0.000000e+00 : f32
    %56 = vector.broadcast %cst_19 : f32 to vector<32x6xf32>
    %57 = tpu.concatenate %55, %56 in 1 : vector<32x506xf32>, vector<32x6xf32> -> vector<32x512xf32>
    %58 = tpu.concatenate %48, %51, %54, %57 in 0 : vector<32x512xf32>, vector<32x512xf32>, vector<32x512xf32>, vector<32x512xf32> -> vector<128x512xf32>
    %59 = vector.extract_strided_slice %1 {offsets = [0, 0], sizes = [40, 128], strides = [1, 1]} : vector<80x128xf32> to vector<40x128xf32>
    %cst_20 = arith.constant dense<0.000000e+00> : vector<40x512xf32>
    %60 = tpu.matmul %59, %58, %cst_20 {dimension_numbers = #tpu.dot_dimension_numbers<[1], [0], [0], [1], [0, 0, 1, 1], [], []>} : vector<40x128xf32>, vector<128x512xf32>, vector<40x512xf32> -> vector<40x512xf32>
    %61 = vector.extract_strided_slice %1 {offsets = [40, 113], sizes = [40, 1], strides = [1, 1]} : vector<80x128xf32> to vector<40x1xf32>
    %62 = vector.broadcast %61 : vector<40x1xf32> to vector<40x512xf32>
    %63 = arith.addf %60, %62 : vector<40x512xf32>
    %cst_21 = arith.constant 0.000000e+00 : f32
    %64 = vector.broadcast %cst_21 : f32 to vector<40x512xf32>
    %65 = arith.maximumf %63, %64 : vector<40x512xf32>
    %66 = vector.extract_strided_slice %65 {offsets = [0, 2], sizes = [40, 510], strides = [1, 1]} : vector<40x512xf32> to vector<40x510xf32>
    %cst_22 = arith.constant 0.000000e+00 : f32
    %67 = vector.broadcast %cst_22 : f32 to vector<40x2xf32>
    %68 = tpu.concatenate %66, %67 in 1 : vector<40x510xf32>, vector<40x2xf32> -> vector<40x512xf32>
    %69 = arith.maximumf %65, %68 : vector<40x512xf32>
    %c0_23 = arith.constant 0 : index
    %c0_24 = arith.constant 0 : index
    %70 = vector.load %arg3[%c0_23, %c0_24] : memref<512x8xf32, #tpu.memory_space<vmem>>, vector<512x8xf32>
    %cst_25 = arith.constant dense<0.000000e+00> : vector<40x8xf32>
    %71 = tpu.matmul %69, %70, %cst_25 {dimension_numbers = #tpu.dot_dimension_numbers<[1], [0], [0], [1], [0, 0, 1, 1], [], []>} : vector<40x512xf32>, vector<512x8xf32>, vector<40x8xf32> -> vector<40x8xf32>
    %72 = vector.extract_strided_slice %1 {offsets = [40, 0], sizes = [40, 40], strides = [1, 1]} : vector<80x128xf32> to vector<40x40xf32>
    %cst_26 = arith.constant dense<0.000000e+00> : vector<40x8xf32>
    %73 = tpu.matmul %72, %71, %cst_26 {dimension_numbers = #tpu.dot_dimension_numbers<[1], [0], [0], [1], [0, 0, 1, 1], [], []>} : vector<40x40xf32>, vector<40x8xf32>, vector<40x8xf32> -> vector<40x8xf32>
    %74 = vector.extract_strided_slice %1 {offsets = [40, 114], sizes = [40, 1], strides = [1, 1]} : vector<80x128xf32> to vector<40x1xf32>
    %75 = vector.broadcast %74 : vector<40x1xf32> to vector<40x8xf32>
    %76 = arith.addf %73, %75 : vector<40x8xf32>
    %cst_27 = arith.constant 0.000000e+00 : f32
    %77 = vector.broadcast %cst_27 : f32 to vector<40x8xf32>
    %78 = arith.maximumf %76, %77 : vector<40x8xf32>
    %79 = vector.extract_strided_slice %1 {offsets = [40, 40], sizes = [4, 40], strides = [1, 1]} : vector<80x128xf32> to vector<4x40xf32>
    %cst_28 = arith.constant dense<0.000000e+00> : vector<4x8xf32>
    %80 = tpu.matmul %79, %78, %cst_28 {dimension_numbers = #tpu.dot_dimension_numbers<[1], [0], [0], [1], [0, 0, 1, 1], [], []>} : vector<4x40xf32>, vector<40x8xf32>, vector<4x8xf32> -> vector<4x8xf32>
    %81 = vector.extract_strided_slice %1 {offsets = [40, 115], sizes = [4, 1], strides = [1, 1]} : vector<80x128xf32> to vector<4x1xf32>
    %82 = vector.broadcast %81 : vector<4x1xf32> to vector<4x8xf32>
    %83 = arith.addf %80, %82 : vector<4x8xf32>
    %84 = vector.extract_strided_slice %1 {offsets = [40, 116], sizes = [8, 2], strides = [1, 1]} : vector<80x128xf32> to vector<8x2xf32>
    %cst_29 = arith.constant dense<0.000000e+00> : vector<4x2xf32>
    %85 = tpu.matmul %83, %84, %cst_29 {dimension_numbers = #tpu.dot_dimension_numbers<[1], [0], [0], [1], [0, 0, 1, 1], [], []>} : vector<4x8xf32>, vector<8x2xf32>, vector<4x2xf32> -> vector<4x2xf32>
    %c0_30 = arith.constant 0 : index
    %c0_31 = arith.constant 0 : index
    %86 = vector.load %arg4[%c0_30, %c0_31] : memref<4x2xf32, #tpu.memory_space<vmem>>, vector<4x2xf32>
    tpu.vector_store %arg4[%c0_30, %c0_31], %85 {strides = array<i32>} : memref<4x2xf32, #tpu.memory_space<vmem>>, vector<4x2xf32>,
    return
  }
}

</mosaic_0001>

<llo_original>
// kernel: cnn_feature_extractor_forward.1
$region0: #{cnn_feature_extractor_forward.1}
  #allocation0 [shape = 'u32[]', space=smem, size = 0x4, offset = 0x4, fixed_abs, tag = 'smem constant byte address 0x4 - core index']
  #allocation1 [shape = 'u32[144,128]{1,0:T(1,128)}', space=vmem, size = 0x12000, scoped, tag = 'internal scratch']
  %s0 = inlined_call_operand.vmem [shape: f32[8,320], index: 0, kind: input, shape index: {}]
  %s1 = inlined_call_operand.vmem [shape: f32[80,128], index: 1, kind: input, shape index: {}]
  %s2 = inlined_call_operand.vmem [shape: bf16[320,256], index: 2, kind: input, shape index: {}]
  %s3 = inlined_call_operand.vmem [shape: f32[512,8], index: 3, kind: input, shape index: {}]
  %s4 = inlined_call_operand.vmem [shape: f32[4,2], index: 4, kind: output, shape index: {}]
  %s5 = sld [smem:[#allocation0]]
  $region26: #{cnn_feature_extractor_forward.1} parent=0
    _
  %s7 = ssub.s32 1, %s5
  %s8 = scalar_select 0, %s7, %s5
  // Predicated region
  $region2: #{cnn_feature_extractor_forward.1} parent=0 // pred_check
    _
  $region3: #{cnn_feature_extractor_forward.1} parent=0 // pred_check_branch
    %10 = sbr.rel (0) target = $region5
  $region4: #{cnn_feature_extractor_forward.1} parent=0 // pred_region
    _
  $region5: #{cnn_feature_extractor_forward.1} parent=0 // pred_fallthru
    _
  // Predicated region
  $region6: #{cnn_feature_extractor_forward.1} parent=0 // pred_check
    _
  $region7: #{cnn_feature_extractor_forward.1} parent=0 // pred_check_branch
    %12 = sbr.rel (0) target = $region9
  $region8: #{cnn_feature_extractor_forward.1} parent=0 // pred_region
    _
  $region9: #{cnn_feature_extractor_forward.1} parent=0 // pred_fallthru
    _
  // Predicated region
  $region10: #{cnn_feature_extractor_forward.1} parent=0 // pred_check
    _
  $region11: #{cnn_feature_extractor_forward.1} parent=0 // pred_check_branch
    %14 = sbr.rel (0) target = $region13
  $region12: #{cnn_feature_extractor_forward.1} parent=0 // pred_region
    _
  $region13: #{cnn_feature_extractor_forward.1} parent=0 // pred_fallthru
    _
  // Predicated region
  $region14: #{cnn_feature_extractor_forward.1} parent=0 // pred_check
    _
  $region15: #{cnn_feature_extractor_forward.1} parent=0 // pred_check_branch
    %16 = sbr.rel (0) target = $region17
  $region16: #{cnn_feature_extractor_forward.1} parent=0 // pred_region
    _
  $region17: #{cnn_feature_extractor_forward.1} parent=0 // pred_fallthru
    _
  %v17 = vld [vmem:[%s0] sm:$0xff]
  %v18 = vld [vmem:[%s0 + $0x8] sm:$0xff]
  %v19 = vld [vmem:[%s0 + $0x10] sm:$0xff]
  %v20 = vld [vmem:[%s1] sm:$0xff]
  %v21 = vld [vmem:[%s1 + $0x8] sm:$0xff]
  %v22 = vld [vmem:[%s1 + $0x10] sm:$0xff]
  %v23 = vld [vmem:[%s1 + $0x18] sm:$0xff]
  %v24 = vld [vmem:[%s1 + $0x20] sm:$0xff]
  %v25 = vld [vmem:[%s1 + $0x28] sm:$0xff]
  %v26 = vld [vmem:[%s1 + $0x30] sm:$0xff]
  %v27 = vld [vmem:[%s1 + $0x38] sm:$0xff]
  %v28 = vld [vmem:[%s1 + $0x40] sm:$0xff]
  %v29 = vld [vmem:[%s1 + $0x48] sm:$0xff]
  %33 = vrot.lane.b32.xlu0 %v17, 127
  %v34 = vpop.permute.xlu0 %33
  %35 = vrot.lane.b32.xlu0 %v18, 127
  %v36 = vpop.permute.xlu0 %35
  %37 = vrot.lane.b32.xlu0 %v19, 127
  %v38 = vpop.permute.xlu0 %37
  %vm39 = vcmask 1039360
  %v40 = vsel %vm39, %v34, %v36
  %v41 = vsel %vm39, %v36, %v38
  %vm45 = vcmask 515072
  %v46 = vsel %vm45, %v38, 0.0
  %v47 = vmax.f32 %v17, %v40
  %v48 = vmax.f32 %v18, %v41
  %v49 = vmax.f32 %v19, %v46
  %50 = vrot.lane.b32.xlu0 %v17, 126
  %v51 = vpop.permute.xlu0 %50
  %52 = vrot.lane.b32.xlu0 %v18, 126
  %v53 = vpop.permute.xlu0 %52
  %54 = vrot.lane.b32.xlu0 %v19, 126
  %v55 = vpop.permute.xlu0 %54
  %vm56 = vcmask 1031168
  %v57 = vsel %vm56, %v51, %v53
  %v58 = vsel %vm56, %v53, %v55
  %vm62 = vcmask 506880
  %v63 = vsel %vm62, %v55, 0.0
  %v64 = vmax.f32 %v47, %v57
  %v65 = vmax.f32 %v48, %v58
  %v66 = vmax.f32 %v49, %v63
  %v67 = vld [vmem:[%s2] sm:$0xff]
  %v68 = vld [vmem:[%s2 + $0x8] sm:$0xff]
  %v69 = vld [vmem:[%s2 + $0x10] sm:$0xff]
  %v70 = vld [vmem:[%s2 + $0x18] sm:$0xff]
  %v71 = vld [vmem:[%s2 + $0x20] sm:$0xff]
  %v72 = vld [vmem:[%s2 + $0x28] sm:$0xff]
  %v73 = vld [vmem:[%s2 + $0x30] sm:$0xff]
  %v74 = vld [vmem:[%s2 + $0x38] sm:$0xff]
  %v75 = vld [vmem:[%s2 + $0x40] sm:$0xff]
  %v76 = vld [vmem:[%s2 + $0x48] sm:$0xff]
  %v77 = vld [vmem:[%s2 + $0x50] sm:$0xff]
  %v78 = vld [vmem:[%s2 + $0x58] sm:$0xff]
  %v79 = vld [vmem:[%s2 + $0x60] sm:$0xff]
  %v80 = vld [vmem:[%s2 + $0x68] sm:$0xff]
  %v81 = vld [vmem:[%s2 + $0x70] sm:$0xff]
  %v82 = vld [vmem:[%s2 + $0x78] sm:$0xff]
  %v83 = vld [vmem:[%s2 + $0x80] sm:$0xff]
  %v84 = vld [vmem:[%s2 + $0x88] sm:$0xff]
  %v85 = vld [vmem:[%s2 + $0x90] sm:$0xff]
  %v86 = vld [vmem:[%s2 + $0x98] sm:$0xff]
  %v87 = vld [vmem:[%s2 + $0xa0] sm:$0xff]
  %v88 = vld [vmem:[%s2 + $0xa8] sm:$0xff]
  %v89 = vld [vmem:[%s2 + $0xb0] sm:$0xff]
  %v90 = vld [vmem:[%s2 + $0xb8] sm:$0xff]
  %v91 = vld [vmem:[%s2 + $0xc0] sm:$0xff]
  %v92 = vld [vmem:[%s2 + $0xc8] sm:$0xff]
  %v93 = vld [vmem:[%s2 + $0xd0] sm:$0xff]
  %v94 = vld [vmem:[%s2 + $0xd8] sm:$0xff]
  %v95 = vld [vmem:[%s2 + $0xe0] sm:$0xff]
  %v96 = vld [vmem:[%s2 + $0xe8] sm:$0xff]
  %v97 = vld [vmem:[%s2 + $0xf0] sm:$0xff]
  %v98 = vld [vmem:[%s2 + $0xf8] sm:$0xff]
  %v99 = vld [vmem:[%s2 + $0x100] sm:$0xff]
  %v100 = vld [vmem:[%s2 + $0x108] sm:$0xff]
  %v101 = vld [vmem:[%s2 + $0x110] sm:$0xff]
  %v102 = vld [vmem:[%s2 + $0x118] sm:$0xff]
  %v103 = vld [vmem:[%s2 + $0x120] sm:$0xff]
  %v104 = vld [vmem:[%s2 + $0x128] sm:$0xff]
  %v105 = vld [vmem:[%s2 + $0x130] sm:$0xff]
  %v106 = vld [vmem:[%s2 + $0x138] sm:$0xff]
  %v107 = vunpack.c.l.bf16 %v67
  %v108 = vunpack.c.h.bf16 %v67
  %v109 = vunpack.c.l.bf16 %v68
  %v110 = vunpack.c.h.bf16 %v68
  %v111 = vunpack.c.l.bf16 %v69
  %v112 = vunpack.c.h.bf16 %v69
  %v113 = vunpack.c.l.bf16 %v70
  %v114 = vunpack.c.h.bf16 %v70
  %v115 = vunpack.c.l.bf16 %v71
  %v116 = vunpack.c.h.bf16 %v71
  %v117 = vunpack.c.l.bf16 %v72
  %v118 = vunpack.c.h.bf16 %v72
  %v119 = vunpack.c.l.bf16 %v73
  %v120 = vunpack.c.h.bf16 %v73
  %v121 = vunpack.c.l.bf16 %v74
  %v122 = vunpack.c.h.bf16 %v74
  %v123 = vunpack.c.l.bf16 %v75
  %v124 = vunpack.c.h.bf16 %v75
  %v125 = vunpack.c.l.bf16 %v76
  %v126 = vunpack.c.h.bf16 %v76
  %v127 = vunpack.c.l.bf16 %v77
  %v128 = vunpack.c.h.bf16 %v77
  %v129 = vunpack.c.l.bf16 %v78
  %v130 = vunpack.c.h.bf16 %v78
  %v131 = vunpack.c.l.bf16 %v79
  %v132 = vunpack.c.h.bf16 %v79
  %v133 = vunpack.c.l.bf16 %v80
  %v134 = vunpack.c.h.bf16 %v80
  %v135 = vunpack.c.l.bf16 %v81
  %v136 = vunpack.c.h.bf16 %v81
  %v137 = vunpack.c.l.bf16 %v82
  %v138 = vunpack.c.h.bf16 %v82
  %v139 = vunpack.c.l.bf16 %v83
  %v140 = vunpack.c.h.bf16 %v83
  %v141 = vunpack.c.l.bf16 %v84
  %v142 = vunpack.c.h.bf16 %v84
  %v143 = vunpack.c.l.bf16 %v85
  %v144 = vunpack.c.h.bf16 %v85
  %v145 = vunpack.c.l.bf16 %v86
  %v146 = vunpack.c.h.bf16 %v86
  %v147 = vunpack.c.l.bf16 %v87
  %v148 = vunpack.c.h.bf16 %v87
  %v149 = vunpack.c.l.bf16 %v88
  %v150 = vunpack.c.h.bf16 %v88
  %v151 = vunpack.c.l.bf16 %v89
  %v152 = vunpack.c.h.bf16 %v89
  %v153 = vunpack.c.l.bf16 %v90
  %v154 = vunpack.c.h.bf16 %v90
  %v155 = vunpack.c.l.bf16 %v91
  %v156 = vunpack.c.h.bf16 %v91
  %v157 = vunpack.c.l.bf16 %v92
  %v158 = vunpack.c.h.bf16 %v92
  %v159 = vunpack.c.l.bf16 %v93
  %v160 = vunpack.c.h.bf16 %v93
  %v161 = vunpack.c.l.bf16 %v94
  %v162 = vunpack.c.h.bf16 %v94
  %v163 = vunpack.c.l.bf16 %v95
  %v164 = vunpack.c.h.bf16 %v95
  %v165 = vunpack.c.l.bf16 %v96
  %v166 = vunpack.c.h.bf16 %v96
  %v167 = vunpack.c.l.bf16 %v97
  %v168 = vunpack.c.h.bf16 %v97
  %v169 = vunpack.c.l.bf16 %v98
  %v170 = vunpack.c.h.bf16 %v98
  %v171 = vunpack.c.l.bf16 %v99
  %v172 = vunpack.c.h.bf16 %v99
  %v173 = vunpack.c.l.bf16 %v100
  %v174 = vunpack.c.h.bf16 %v100
  %v175 = vunpack.c.l.bf16 %v101
  %v176 = vunpack.c.h.bf16 %v101
  %v177 = vunpack.c.l.bf16 %v102
  %v178 = vunpack.c.h.bf16 %v102
  %v179 = vunpack.c.l.bf16 %v103
  %v180 = vunpack.c.h.bf16 %v103
  %v181 = vunpack.c.l.bf16 %v104
  %v182 = vunpack.c.h.bf16 %v104
  %v183 = vunpack.c.l.bf16 %v105
  %v184 = vunpack.c.h.bf16 %v105
  %v185 = vunpack.c.l.bf16 %v106
  %v186 = vunpack.c.h.bf16 %v106
  %vm187 = vcmask 523264
  %v189 = vsel %vm187, %v49, 0
  %191 = vmatprep.subr.mxu0 0.0
  %192 = vmatpush1.msra.mxu0 %v137
  %193 = vmatprep.subr.mxu0 0.0
  %194 = vmatpush1.msra.mxu0 %v135
  %195 = vmatprep.subr.mxu0 0.0
  %196 = vmatpush1.msra.mxu0 %v133
  %197 = vmatprep.subr.mxu0 0.0
  %198 = vmatpush1.msra.mxu0 %v131
  %199 = vmatprep.subr.mxu0 0.0
  %200 = vmatpush1.msra.mxu0 %v129
  %201 = vmatprep.subr.mxu0 0.0
  %202 = vmatpush1.msra.mxu0 %v127
  %203 = vmatprep.subr.mxu0 0.0
  %204 = vmatpush1.msra.mxu0 %v125
  %205 = vmatprep.subr.mxu0 0.0
  %206 = vmatpush1.msra.mxu0 %v123
  %207 = vmatprep.subr.mxu0 0.0
  %208 = vmatpush1.msra.mxu0 %v121
  %209 = vmatprep.subr.mxu0 0.0
  %210 = vmatpush1.msra.mxu0 %v119
  %211 = vmatprep.subr.mxu0 0.0
  %212 = vmatpush1.msra.mxu0 %v117
  %213 = vmatprep.subr.mxu0 0.0
  %214 = vmatpush1.msra.mxu0 %v115
  %215 = vmatprep.subr.mxu0 0.0
  %216 = vmatpush1.msra.mxu0 %v113
  %217 = vmatprep.subr.mxu0 0.0
  %218 = vmatpush1.msra.mxu0 %v111
  %219 = vmatprep.subr.mxu0 0.0
  %220 = vmatpush1.msra.mxu0 %v109
  %221 = vmatprep.subr.mxu0 0.0
  %222 = vmatpush1.msra.mxu0 %v107
  %223 = vmatprep.subr.mxu0 0.0
  %224 = vmatpush2.msra.mxu0 %v169
  %225 = vmatprep.subr.mxu0 0.0
  %226 = vmatpush2.msra.mxu0 %v167
  %227 = vmatprep.subr.mxu0 0.0
  %228 = vmatpush2.msra.mxu0 %v165
  %229 = vmatprep.subr.mxu0 0.0
  %230 = vmatpush2.msra.mxu0 %v163
  %231 = vmatprep.subr.mxu0 0.0
  %232 = vmatpush2.msra.mxu0 %v161
  %233 = vmatprep.subr.mxu0 0.0
  %234 = vmatpush2.msra.mxu0 %v159
  %235 = vmatprep.subr.mxu0 0.0
  %236 = vmatpush2.msra.mxu0 %v157
  %237 = vmatprep.subr.mxu0 0.0
  %238 = vmatpush2.msra.mxu0 %v155
  %239 = vmatprep.subr.mxu0 0.0
  %240 = vmatpush2.msra.mxu0 %v153
  %241 = vmatprep.subr.mxu0 0.0
  %242 = vmatpush2.msra.mxu0 %v151
  %243 = vmatprep.subr.mxu0 0.0
  %244 = vmatpush2.msra.mxu0 %v149
  %245 = vmatprep.subr.mxu0 0.0
  %246 = vmatpush2.msra.mxu0 %v147
  %247 = vmatprep.subr.mxu0 0.0
  %248 = vmatpush2.msra.mxu0 %v145
  %249 = vmatprep.subr.mxu0 0.0
  %250 = vmatpush2.msra.mxu0 %v143
  %251 = vmatprep.subr.mxu0 0.0
  %252 = vmatpush2.msra.mxu0 %v141
  %253 = vmatprep.subr.mxu0 0.0
  %254 = vmatpush2.msra.mxu0 %v139
  %255 = vmatprep.mubr.f32.mxu0 %v48
  %256 = vmatmul.mubr.f32.gmra.mxu0 %v47
  %v257 = vpop.f32.mrf.mxu0
  %v258 = vadd.f32 0.0, %v257
  %v259 = vpop.f32.mrf.mxu0
  %260 = vdwg.mxu0
  %261 = vmatprep.subr.mxu0 0.0
  %262 = vmatpush1.msra.mxu0 0.0
  %263 = vmatprep.subr.mxu0 0.0
  %264 = vmatpush1.msra.mxu0 0.0
  %265 = vmatprep.subr.mxu0 0.0
  %266 = vmatpush1.msra.mxu0 0.0
  %267 = vmatprep.subr.mxu0 0.0
  %268 = vmatpush1.msra.mxu0 0.0
  %269 = vmatprep.subr.mxu0 0.0
  %270 = vmatpush1.msra.mxu0 0.0
  %271 = vmatprep.subr.mxu0 0.0
  %272 = vmatpush1.msra.mxu0 0.0
  %273 = vmatprep.subr.mxu0 0.0
  %274 = vmatpush1.msra.mxu0 0.0
  %275 = vmatprep.subr.mxu0 0.0
  %276 = vmatpush1.msra.mxu0 0.0
  %277 = vmatprep.subr.mxu0 0.0
  %278 = vmatpush1.msra.mxu0 %v185
  %279 = vmatprep.subr.mxu0 0.0
  %280 = vmatpush1.msra.mxu0 %v183
  %281 = vmatprep.subr.mxu0 0.0
  %282 = vmatpush1.msra.mxu0 %v181
  %283 = vmatprep.subr.mxu0 0.0
  %284 = vmatpush1.msra.mxu0 %v179
  %285 = vmatprep.subr.mxu0 0.0
  %286 = vmatpush1.msra.mxu0 %v177
  %287 = vmatprep.subr.mxu0 0.0
  %288 = vmatpush1.msra.mxu0 %v175
  %289 = vmatprep.subr.mxu0 0.0
  %290 = vmatpush1.msra.mxu0 %v173
  %291 = vmatprep.subr.mxu0 0.0
  %292 = vmatpush1.msra.mxu0 %v171
  %293 = vmatprep.subr.mxu0 0.0
  %294 = vmatpush2.msra.mxu0 0.0
  %295 = vmatprep.subr.mxu0 0.0
  %296 = vmatpush2.msra.mxu0 0.0
  %297 = vmatprep.subr.mxu0 0.0
  %298 = vmatpush2.msra.mxu0 0.0
  %299 = vmatprep.subr.mxu0 0.0
  %300 = vmatpush2.msra.mxu0 0.0
  %301 = vmatprep.subr.mxu0 0.0
  %302 = vmatpush2.msra.mxu0 0.0
  %303 = vmatprep.subr.mxu0 0.0
  %304 = vmatpush2.msra.mxu0 0.0
  %305 = vmatprep.subr.mxu0 0.0
  %306 = vmatpush2.msra.mxu0 0.0
  %307 = vmatprep.subr.mxu0 0.0
  %308 = vmatpush2.msra.mxu0 0.0
  %309 = vmatprep.subr.mxu0 0.0
  %310 = vmatpush2.msra.mxu0 0.0
  %311 = vmatprep.subr.mxu0 0.0
  %312 = vmatpush2.msra.mxu0 0.0
  %313 = vmatprep.subr.mxu0 0.0
  %314 = vmatpush2.msra.mxu0 0.0
  %315 = vmatprep.subr.mxu0 0.0
  %316 = vmatpush2.msra.mxu0 0.0
  %317 = vmatprep.subr.mxu0 0.0
  %318 = vmatpush2.msra.mxu0 0.0
  %319 = vmatprep.subr.mxu0 0.0
  %320 = vmatpush2.msra.mxu0 0.0
  %321 = vmatprep.subr.mxu0 0.0
  %322 = vmatpush2.msra.mxu0 0.0
  %323 = vmatprep.subr.mxu0 0.0
  %324 = vmatpush2.msra.mxu0 0.0
  %325 = vmatprep.mubr.f32.mxu0 0.0
  %326 = vmatmul.mubr.f32.gmra.mxu0 %v189
  %v327 = vpop.f32.mrf.mxu0
  %v328 = vadd.f32 %v258, %v327
  %v329 = vpop.f32.mrf.mxu0
  %330 = vdwg.mxu0
  %v332 = vsel %vm187, %v66, 0
  %334 = vmatprep.subr.mxu0 0.0
  %335 = vmatpush1.msra.mxu0 %v138
  %336 = vmatprep.subr.mxu0 0.0
  %337 = vmatpush1.msra.mxu0 %v136
  %338 = vmatprep.subr.mxu0 0.0
  %339 = vmatpush1.msra.mxu0 %v134
  %340 = vmatprep.subr.mxu0 0.0
  %341 = vmatpush1.msra.mxu0 %v132
  %342 = vmatprep.subr.mxu0 0.0
  %343 = vmatpush1.msra.mxu0 %v130
  %344 = vmatprep.subr.mxu0 0.0
  %345 = vmatpush1.msra.mxu0 %v128
  %346 = vmatprep.subr.mxu0 0.0
  %347 = vmatpush1.msra.mxu0 %v126
  %348 = vmatprep.subr.mxu0 0.0
  %349 = vmatpush1.msra.mxu0 %v124
  %350 = vmatprep.subr.mxu0 0.0
  %351 = vmatpush1.msra.mxu0 %v122
  %352 = vmatprep.subr.mxu0 0.0
  %353 = vmatpush1.msra.mxu0 %v120
  %354 = vmatprep.subr.mxu0 0.0
  %355 = vmatpush1.msra.mxu0 %v118
  %356 = vmatprep.subr.mxu0 0.0
  %357 = vmatpush1.msra.mxu0 %v116
  %358 = vmatprep.subr.mxu0 0.0
  %359 = vmatpush1.msra.mxu0 %v114
  %360 = vmatprep.subr.mxu0 0.0
  %361 = vmatpush1.msra.mxu0 %v112
  %362 = vmatprep.subr.mxu0 0.0
  %363 = vmatpush1.msra.mxu0 %v110
  %364 = vmatprep.subr.mxu0 0.0
  %365 = vmatpush1.msra.mxu0 %v108
  %366 = vmatprep.subr.mxu0 0.0
  %367 = vmatpush2.msra.mxu0 %v170
  %368 = vmatprep.subr.mxu0 0.0
  %369 = vmatpush2.msra.mxu0 %v168
  %370 = vmatprep.subr.mxu0 0.0
  %371 = vmatpush2.msra.mxu0 %v166
  %372 = vmatprep.subr.mxu0 0.0
  %373 = vmatpush2.msra.mxu0 %v164
  %374 = vmatprep.subr.mxu0 0.0
  %375 = vmatpush2.msra.mxu0 %v162
  %376 = vmatprep.subr.mxu0 0.0
  %377 = vmatpush2.msra.mxu0 %v160
  %378 = vmatprep.subr.mxu0 0.0
  %379 = vmatpush2.msra.mxu0 %v158
  %380 = vmatprep.subr.mxu0 0.0
  %381 = vmatpush2.msra.mxu0 %v156
  %382 = vmatprep.subr.mxu0 0.0
  %383 = vmatpush2.msra.mxu0 %v154
  %384 = vmatprep.subr.mxu0 0.0
  %385 = vmatpush2.msra.mxu0 %v152
  %386 = vmatprep.subr.mxu0 0.0
  %387 = vmatpush2.msra.mxu0 %v150
  %388 = vmatprep.subr.mxu0 0.0
  %389 = vmatpush2.msra.mxu0 %v148
  %390 = vmatprep.subr.mxu0 0.0
  %391 = vmatpush2.msra.mxu0 %v146
  %392 = vmatprep.subr.mxu0 0.0
  %393 = vmatpush2.msra.mxu0 %v144
  %394 = vmatprep.subr.mxu0 0.0
  %395 = vmatpush2.msra.mxu0 %v142
  %396 = vmatprep.subr.mxu0 0.0
  %397 = vmatpush2.msra.mxu0 %v140
  %398 = vmatprep.mubr.f32.mxu0 %v65
  %399 = vmatmul.mubr.f32.gmra.mxu0 %v64
  %v400 = vpop.f32.mrf.mxu0
  %v401 = vadd.f32 0.0, %v400
  %v402 = vpop.f32.mrf.mxu0
  %403 = vdwg.mxu0
  %404 = vmatprep.subr.mxu0 0.0
  %405 = vmatpush1.msra.mxu0 0.0
  %406 = vmatprep.subr.mxu0 0.0
  %407 = vmatpush1.msra.mxu0 0.0
  %408 = vmatprep.subr.mxu0 0.0
  %409 = vmatpush1.msra.mxu0 0.0
  %410 = vmatprep.subr.mxu0 0.0
  %411 = vmatpush1.msra.mxu0 0.0
  %412 = vmatprep.subr.mxu0 0.0
  %413 = vmatpush1.msra.mxu0 0.0
  %414 = vmatprep.subr.mxu0 0.0
  %415 = vmatpush1.msra.mxu0 0.0
  %416 = vmatprep.subr.mxu0 0.0
  %417 = vmatpush1.msra.mxu0 0.0
  %418 = vmatprep.subr.mxu0 0.0
  %419 = vmatpush1.msra.mxu0 0.0
  %420 = vmatprep.subr.mxu0 0.0
  %421 = vmatpush1.msra.mxu0 %v186
  %422 = vmatprep.subr.mxu0 0.0
  %423 = vmatpush1.msra.mxu0 %v184
  %424 = vmatprep.subr.mxu0 0.0
  %425 = vmatpush1.msra.mxu0 %v182
  %426 = vmatprep.subr.mxu0 0.0
  %427 = vmatpush1.msra.mxu0 %v180
  %428 = vmatprep.subr.mxu0 0.0
  %429 = vmatpush1.msra.mxu0 %v178
  %430 = vmatprep.subr.mxu0 0.0
  %431 = vmatpush1.msra.mxu0 %v176
  %432 = vmatprep.subr.mxu0 0.0
  %433 = vmatpush1.msra.mxu0 %v174
  %434 = vmatprep.subr.mxu0 0.0
  %435 = vmatpush1.msra.mxu0 %v172
  %436 = vmatprep.subr.mxu0 0.0
  %437 = vmatpush2.msra.mxu0 0.0
  %438 = vmatprep.subr.mxu0 0.0
  %439 = vmatpush2.msra.mxu0 0.0
  %440 = vmatprep.subr.mxu0 0.0
  %441 = vmatpush2.msra.mxu0 0.0
  %442 = vmatprep.subr.mxu0 0.0
  %443 = vmatpush2.msra.mxu0 0.0
  %444 = vmatprep.subr.mxu0 0.0
  %445 = vmatpush2.msra.mxu0 0.0
  %446 = vmatprep.subr.mxu0 0.0
  %447 = vmatpush2.msra.mxu0 0.0
  %448 = vmatprep.subr.mxu0 0.0
  %449 = vmatpush2.msra.mxu0 0.0
  %450 = vmatprep.subr.mxu0 0.0
  %451 = vmatpush2.msra.mxu0 0.0
  %452 = vmatprep.subr.mxu0 0.0
  %453 = vmatpush2.msra.mxu0 0.0
  %454 = vmatprep.subr.mxu0 0.0
  %455 = vmatpush2.msra.mxu0 0.0
  %456 = vmatprep.subr.mxu0 0.0
  %457 = vmatpush2.msra.mxu0 0.0
  %458 = vmatprep.subr.mxu0 0.0
  %459 = vmatpush2.msra.mxu0 0.0
  %460 = vmatprep.subr.mxu0 0.0
  %461 = vmatpush2.msra.mxu0 0.0
  %462 = vmatprep.subr.mxu0 0.0
  %463 = vmatpush2.msra.mxu0 0.0
  %464 = vmatprep.subr.mxu0 0.0
  %465 = vmatpush2.msra.mxu0 0.0
  %466 = vmatprep.subr.mxu0 0.0
  %467 = vmatpush2.msra.mxu0 0.0
  %468 = vmatprep.mubr.f32.mxu0 0.0
  %469 = vmatmul.mubr.f32.gmra.mxu0 %v332
  %v470 = vpop.f32.mrf.mxu0
  %v471 = vadd.f32 %v401, %v470
  %v472 = vpop.f32.mrf.mxu0
  %473 = vdwg.mxu0
  %474 = vrot.lane.b32.xlu0 %v17, 32
  %v475 = vpop.permute.xlu0 %474
  %476 = vrot.lane.b32.xlu0 %v18, 32
  %v477 = vpop.permute.xlu0 %476
  %vm478 = vcmask 261120
  %v479 = vsel %vm478, %v475, %v477
  %481 = vrot.lane.b32.xlu0 %v19, 64
  %v482 = vpop.permute.xlu0 %481
  %v484 = vsel %vm187, %v479, %v482
  %488 = vrot.lane.b32.xlu0 %v484, 127
  %v489 = vpop.permute.xlu0 %488
  %490 = vrot.lane.b32.xlu0 %v328, 127
  %v491 = vpop.permute.xlu0 %490
  %492 = vrot.lane.b32.xlu0 %v471, 127
  %v493 = vpop.permute.xlu0 %492
  %v494 = vsel %vm39, %v489, %v491
  %v495 = vsel %vm39, %v491, %v493
  %v499 = vsel %vm39, %v493, 0.0
  %504 = vrot.lane.b32.xlu0 %v25, 40
  %v505 = vpop.permute.xlu0 %504
  %506 = vrot.lane.b32.xlu0 %v26, 40
  %v507 = vpop.permute.xlu0 %506
  %508 = vrot.lane.b32.xlu0 %v27, 40
  %v509 = vpop.permute.xlu0 %508
  %510 = vrot.lane.b32.xlu0 %v28, 40
  %v511 = vpop.permute.xlu0 %510
  %vm512 = vcmask 64512
  %v513 = vsel %vm512, %v505, 0
  %v515 = vsel %vm512, %v507, 0
  %v517 = vsel %vm512, %v509, 0
  %v519 = vsel %vm512, %v511, 0
  %521 = vmatprep.subr.mxu0 0.0
  %522 = vmatpush1.msra.mxu0 0.0
  %523 = vmatprep.subr.mxu0 0.0
  %524 = vmatpush1.msra.mxu0 0.0
  %525 = vmatprep.subr.mxu0 0.0
  %526 = vmatpush1.msra.mxu0 0.0
  %527 = vmatprep.subr.mxu0 0.0
  %528 = vmatpush1.msra.mxu0 0.0
  %529 = vmatprep.subr.mxu0 0.0
  %530 = vmatpush1.msra.mxu0 0.0
  %531 = vmatprep.subr.mxu0 0.0
  %532 = vmatpush1.msra.mxu0 0.0
  %533 = vmatprep.subr.mxu0 0.0
  %534 = vmatpush1.msra.mxu0 0.0
  %535 = vmatprep.subr.mxu0 0.0
  %536 = vmatpush1.msra.mxu0 0.0
  %537 = vmatprep.subr.mxu0 0.0
  %538 = vmatpush1.msra.mxu0 0.0
  %539 = vmatprep.subr.mxu0 0.0
  %540 = vmatpush1.msra.mxu0 0.0
  %541 = vmatprep.subr.mxu0 0.0
  %542 = vmatpush1.msra.mxu0 0.0
  %543 = vmatprep.subr.mxu0 0.0
  %544 = vmatpush1.msra.mxu0 0.0
  %545 = vmatprep.subr.mxu0 0.0
  %546 = vmatpush1.msra.mxu0 0.0
  %547 = vmatprep.subr.mxu0 0.0
  %548 = vmatpush1.msra.mxu0 0.0
  %549 = vmatprep.subr.mxu0 0.0
  %550 = vmatpush1.msra.mxu0 0.0
  %551 = vmatprep.subr.mxu0 %v495
  %552 = vmatpush1.msra.mxu0 %v494
  %553 = vmatprep.subr.mxu0 0.0
  %554 = vmatpush2.msra.mxu0 0.0
  %555 = vmatprep.subr.mxu0 0.0
  %556 = vmatpush2.msra.mxu0 0.0
  %557 = vmatprep.subr.mxu0 0.0
  %558 = vmatpush2.msra.mxu0 0.0
  %559 = vmatprep.subr.mxu0 0.0
  %560 = vmatpush2.msra.mxu0 0.0
  %561 = vmatprep.subr.mxu0 0.0
  %562 = vmatpush2.msra.mxu0 0.0
  %563 = vmatprep.subr.mxu0 0.0
  %564 = vmatpush2.msra.mxu0 0.0
  %565 = vmatprep.subr.mxu0 0.0
  %566 = vmatpush2.msra.mxu0 0.0
  %567 = vmatprep.subr.mxu0 0.0
  %568 = vmatpush2.msra.mxu0 0.0
  %569 = vmatprep.subr.mxu0 0.0
  %570 = vmatpush2.msra.mxu0 0.0
  %571 = vmatprep.subr.mxu0 0.0
  %572 = vmatpush2.msra.mxu0 0.0
  %573 = vmatprep.subr.mxu0 0.0
  %574 = vmatpush2.msra.mxu0 0.0
  %575 = vmatprep.subr.mxu0 0.0
  %576 = vmatpush2.msra.mxu0 0.0
  %577 = vmatprep.subr.mxu0 0.0
  %578 = vmatpush2.msra.mxu0 0.0
  %579 = vmatprep.subr.mxu0 0.0
  %580 = vmatpush2.msra.mxu0 0.0
  %581 = vmatprep.subr.mxu0 0.0
  %582 = vmatpush2.msra.mxu0 0.0
  %583 = vmatprep.subr.mxu0 0.0
  %584 = vmatpush2.msra.mxu0 0.0
  %585 = vmatprep.mubr.f32.mxu0 0.0
  %586 = vmatmul.mubr.f32.gmra.mxu0 %v513
  %v587 = vpop.f32.mrf.mxu0
  %v588 = vadd.f32 0.0, %v587
  %v589 = vpop.f32.mrf.mxu0
  %v590 = vadd.f32 0.0, %v589
  %591 = vmatprep.mubr.f32.mxu0 0.0
  %592 = vmatmul.mubr.f32.gmra.mxu0 %v515
  %v593 = vpop.f32.mrf.mxu0
  %v594 = vadd.f32 0.0, %v593
  %v595 = vpop.f32.mrf.mxu0
  %v596 = vadd.f32 0.0, %v595
  %597 = vmatprep.mubr.f32.mxu0 0.0
  %598 = vmatmul.mubr.f32.gmra.mxu0 %v517
  %v599 = vpop.f32.mrf.mxu0
  %v600 = vadd.f32 0.0, %v599
  %v601 = vpop.f32.mrf.mxu0
  %v602 = vadd.f32 0.0, %v601
  %603 = vmatprep.mubr.f32.mxu0 0.0
  %604 = vmatmul.mubr.f32.gmra.mxu0 %v519
  %v605 = vpop.f32.mrf.mxu0
  %v606 = vadd.f32 0.0, %v605
  %v607 = vpop.f32.mrf.mxu0
  %v608 = vadd.f32 0.0, %v607
  %609 = vdwg.mxu0
  %610 = vmatprep.subr.mxu0 0.0
  %611 = vmatpush1.msra.mxu0 0.0
  %612 = vmatprep.subr.mxu0 0.0
  %613 = vmatpush1.msra.mxu0 0.0
  %614 = vmatprep.subr.mxu0 0.0
  %615 = vmatpush1.msra.mxu0 0.0
  %616 = vmatprep.subr.mxu0 0.0
  %617 = vmatpush1.msra.mxu0 0.0
  %618 = vmatprep.subr.mxu0 0.0
  %619 = vmatpush1.msra.mxu0 0.0
  %620 = vmatprep.subr.mxu0 0.0
  %621 = vmatpush1.msra.mxu0 0.0
  %622 = vmatprep.subr.mxu0 0.0
  %623 = vmatpush1.msra.mxu0 0.0
  %624 = vmatprep.subr.mxu0 0.0
  %625 = vmatpush1.msra.mxu0 0.0
  %626 = vmatprep.subr.mxu0 0.0
  %627 = vmatpush1.msra.mxu0 0.0
  %628 = vmatprep.subr.mxu0 0.0
  %629 = vmatpush1.msra.mxu0 0.0
  %630 = vmatprep.subr.mxu0 0.0
  %631 = vmatpush1.msra.mxu0 0.0
  %632 = vmatprep.subr.mxu0 0.0
  %633 = vmatpush1.msra.mxu0 0.0
  %634 = vmatprep.subr.mxu0 0.0
  %635 = vmatpush1.msra.mxu0 0.0
  %636 = vmatprep.subr.mxu0 0.0
  %637 = vmatpush1.msra.mxu0 0.0
  %638 = vmatprep.subr.mxu0 0.0
  %639 = vmatpush1.msra.mxu0 0.0
  %640 = vmatprep.subr.mxu0 %v499
  %641 = vmatpush1.msra.mxu0 %v493
  %642 = vmatprep.subr.mxu0 0.0
  %643 = vmatpush2.msra.mxu0 0.0
  %644 = vmatprep.subr.mxu0 0.0
  %645 = vmatpush2.msra.mxu0 0.0
  %646 = vmatprep.subr.mxu0 0.0
  %647 = vmatpush2.msra.mxu0 0.0
  %648 = vmatprep.subr.mxu0 0.0
  %649 = vmatpush2.msra.mxu0 0.0
  %650 = vmatprep.subr.mxu0 0.0
  %651 = vmatpush2.msra.mxu0 0.0
  %652 = vmatprep.subr.mxu0 0.0
  %653 = vmatpush2.msra.mxu0 0.0
  %654 = vmatprep.subr.mxu0 0.0
  %655 = vmatpush2.msra.mxu0 0.0
  %656 = vmatprep.subr.mxu0 0.0
  %657 = vmatpush2.msra.mxu0 0.0
  %658 = vmatprep.subr.mxu0 0.0
  %659 = vmatpush2.msra.mxu0 0.0
  %660 = vmatprep.subr.mxu0 0.0
  %661 = vmatpush2.msra.mxu0 0.0
  %662 = vmatprep.subr.mxu0 0.0
  %663 = vmatpush2.msra.mxu0 0.0
  %664 = vmatprep.subr.mxu0 0.0
  %665 = vmatpush2.msra.mxu0 0.0
  %666 = vmatprep.subr.mxu0 0.0
  %667 = vmatpush2.msra.mxu0 0.0
  %668 = vmatprep.subr.mxu0 0.0
  %669 = vmatpush2.msra.mxu0 0.0
  %670 = vmatprep.subr.mxu0 0.0
  %671 = vmatpush2.msra.mxu0 0.0
  %672 = vmatprep.subr.mxu0 0.0
  %673 = vmatpush2.msra.mxu0 0.0
  %674 = vmatprep.mubr.f32.mxu0 0.0
  %675 = vmatmul.mubr.f32.gmra.mxu0 %v513
  %v676 = vpop.f32.mrf.mxu0
  %v677 = vadd.f32 0.0, %v676
  %v678 = vpop.f32.mrf.mxu0
  %v679 = vadd.f32 0.0, %v678
  %680 = vmatprep.mubr.f32.mxu0 0.0
  %681 = vmatmul.mubr.f32.gmra.mxu0 %v515
  %v682 = vpop.f32.mrf.mxu0
  %v683 = vadd.f32 0.0, %v682
  %v684 = vpop.f32.mrf.mxu0
  %v685 = vadd.f32 0.0, %v684
  %686 = vmatprep.mubr.f32.mxu0 0.0
  %687 = vmatmul.mubr.f32.gmra.mxu0 %v517
  %v688 = vpop.f32.mrf.mxu0
  %v689 = vadd.f32 0.0, %v688
  %v690 = vpop.f32.mrf.mxu0
  %v691 = vadd.f32 0.0, %v690
  %692 = vmatprep.mubr.f32.mxu0 0.0
  %693 = vmatmul.mubr.f32.gmra.mxu0 %v519
  %v694 = vpop.f32.mrf.mxu0
  %v695 = vadd.f32 0.0, %v694
  %v696 = vpop.f32.mrf.mxu0
  %v697 = vadd.f32 0.0, %v696
  %698 = vdwg.mxu0
  %699 = vrot.lane.b32.xlu0 %v25, 48
  %v700 = vpop.permute.xlu0 %699
  %701 = vrot.lane.b32.xlu0 %v26, 48
  %v702 = vpop.permute.xlu0 %701
  %703 = vrot.lane.b32.xlu0 %v27, 48
  %v704 = vpop.permute.xlu0 %703
  %705 = vrot.lane.b32.xlu0 %v28, 48
  %v706 = vpop.permute.xlu0 %705
  %v707 = vsel %vm512, %v700, 0
  %v709 = vsel %vm512, %v702, 0
  %v711 = vsel %vm512, %v704, 0
  %v713 = vsel %vm512, %v706, 0
  %715 = vmatprep.subr.mxu0 0.0
  %716 = vmatpush1.msra.mxu0 0.0
  %717 = vmatprep.subr.mxu0 0.0
  %718 = vmatpush1.msra.mxu0 0.0
  %719 = vmatprep.subr.mxu0 0.0
  %720 = vmatpush1.msra.mxu0 0.0
  %721 = vmatprep.subr.mxu0 0.0
  %722 = vmatpush1.msra.mxu0 0.0
  %723 = vmatprep.subr.mxu0 0.0
  %724 = vmatpush1.msra.mxu0 0.0
  %725 = vmatprep.subr.mxu0 0.0
  %726 = vmatpush1.msra.mxu0 0.0
  %727 = vmatprep.subr.mxu0 0.0
  %728 = vmatpush1.msra.mxu0 0.0
  %729 = vmatprep.subr.mxu0 0.0
  %730 = vmatpush1.msra.mxu0 0.0
  %731 = vmatprep.subr.mxu0 0.0
  %732 = vmatpush1.msra.mxu0 0.0
  %733 = vmatprep.subr.mxu0 0.0
  %734 = vmatpush1.msra.mxu0 0.0
  %735 = vmatprep.subr.mxu0 0.0
  %736 = vmatpush1.msra.mxu0 0.0
  %737 = vmatprep.subr.mxu0 0.0
  %738 = vmatpush1.msra.mxu0 0.0
  %739 = vmatprep.subr.mxu0 0.0
  %740 = vmatpush1.msra.mxu0 0.0
  %741 = vmatprep.subr.mxu0 0.0
  %742 = vmatpush1.msra.mxu0 0.0
  %743 = vmatprep.subr.mxu0 0.0
  %744 = vmatpush1.msra.mxu0 0.0
  %745 = vmatprep.subr.mxu0 %v328
  %746 = vmatpush1.msra.mxu0 %v484
  %747 = vmatprep.subr.mxu0 0.0
  %748 = vmatpush2.msra.mxu0 0.0
  %749 = vmatprep.subr.mxu0 0.0
  %750 = vmatpush2.msra.mxu0 0.0
  %751 = vmatprep.subr.mxu0 0.0
  %752 = vmatpush2.msra.mxu0 0.0
  %753 = vmatprep.subr.mxu0 0.0
  %754 = vmatpush2.msra.mxu0 0.0
  %755 = vmatprep.subr.mxu0 0.0
  %756 = vmatpush2.msra.mxu0 0.0
  %757 = vmatprep.subr.mxu0 0.0
  %758 = vmatpush2.msra.mxu0 0.0
  %759 = vmatprep.subr.mxu0 0.0
  %760 = vmatpush2.msra.mxu0 0.0
  %761 = vmatprep.subr.mxu0 0.0
  %762 = vmatpush2.msra.mxu0 0.0
  %763 = vmatprep.subr.mxu0 0.0
  %764 = vmatpush2.msra.mxu0 0.0
  %765 = vmatprep.subr.mxu0 0.0
  %766 = vmatpush2.msra.mxu0 0.0
  %767 = vmatprep.subr.mxu0 0.0
  %768 = vmatpush2.msra.mxu0 0.0
  %769 = vmatprep.subr.mxu0 0.0
  %770 = vmatpush2.msra.mxu0 0.0
  %771 = vmatprep.subr.mxu0 0.0
  %772 = vmatpush2.msra.mxu0 0.0
  %773 = vmatprep.subr.mxu0 0.0
  %774 = vmatpush2.msra.mxu0 0.0
  %775 = vmatprep.subr.mxu0 0.0
  %776 = vmatpush2.msra.mxu0 0.0
  %777 = vmatprep.subr.mxu0 0.0
  %778 = vmatpush2.msra.mxu0 0.0
  %779 = vmatprep.mubr.f32.mxu0 0.0
  %780 = vmatmul.mubr.f32.gmra.mxu0 %v707
  %v781 = vpop.f32.mrf.mxu0
  %v782 = vadd.f32 %v588, %v781
  %v783 = vpop.f32.mrf.mxu0
  %v784 = vadd.f32 %v590, %v783
  %785 = vmatprep.mubr.f32.mxu0 0.0
  %786 = vmatmul.mubr.f32.gmra.mxu0 %v709
  %v787 = vpop.f32.mrf.mxu0
  %v788 = vadd.f32 %v594, %v787
  %v789 = vpop.f32.mrf.mxu0
  %v790 = vadd.f32 %v596, %v789
  %791 = vmatprep.mubr.f32.mxu0 0.0
  %792 = vmatmul.mubr.f32.gmra.mxu0 %v711
  %v793 = vpop.f32.mrf.mxu0
  %v794 = vadd.f32 %v600, %v793
  %v795 = vpop.f32.mrf.mxu0
  %v796 = vadd.f32 %v602, %v795
  %797 = vmatprep.mubr.f32.mxu0 0.0
  %798 = vmatmul.mubr.f32.gmra.mxu0 %v713
  %v799 = vpop.f32.mrf.mxu0
  %v800 = vadd.f32 %v606, %v799
  %v801 = vpop.f32.mrf.mxu0
  %v802 = vadd.f32 %v608, %v801
  %803 = vdwg.mxu0
  %804 = vmatprep.subr.mxu0 0.0
  %805 = vmatpush1.msra.mxu0 0.0
  %806 = vmatprep.subr.mxu0 0.0
  %807 = vmatpush1.msra.mxu0 0.0
  %808 = vmatprep.subr.mxu0 0.0
  %809 = vmatpush1.msra.mxu0 0.0
  %810 = vmatprep.subr.mxu0 0.0
  %811 = vmatpush1.msra.mxu0 0.0
  %812 = vmatprep.subr.mxu0 0.0
  %813 = vmatpush1.msra.mxu0 0.0
  %814 = vmatprep.subr.mxu0 0.0
  %815 = vmatpush1.msra.mxu0 0.0
  %816 = vmatprep.subr.mxu0 0.0
  %817 = vmatpush1.msra.mxu0 0.0
  %818 = vmatprep.subr.mxu0 0.0
  %819 = vmatpush1.msra.mxu0 0.0
  %820 = vmatprep.subr.mxu0 0.0
  %821 = vmatpush1.msra.mxu0 0.0
  %822 = vmatprep.subr.mxu0 0.0
  %823 = vmatpush1.msra.mxu0 0.0
  %824 = vmatprep.subr.mxu0 0.0
  %825 = vmatpush1.msra.mxu0 0.0
  %826 = vmatprep.subr.mxu0 0.0
  %827 = vmatpush1.msra.mxu0 0.0
  %828 = vmatprep.subr.mxu0 0.0
  %829 = vmatpush1.msra.mxu0 0.0
  %830 = vmatprep.subr.mxu0 0.0
  %831 = vmatpush1.msra.mxu0 0.0
  %832 = vmatprep.subr.mxu0 0.0
  %833 = vmatpush1.msra.mxu0 0.0
  %834 = vmatprep.subr.mxu0 %v471
  %835 = vmatpush1.msra.mxu0 %v471
  %836 = vmatprep.subr.mxu0 0.0
  %837 = vmatpush2.msra.mxu0 0.0
  %838 = vmatprep.subr.mxu0 0.0
  %839 = vmatpush2.msra.mxu0 0.0
  %840 = vmatprep.subr.mxu0 0.0
  %841 = vmatpush2.msra.mxu0 0.0
  %842 = vmatprep.subr.mxu0 0.0
  %843 = vmatpush2.msra.mxu0 0.0
  %844 = vmatprep.subr.mxu0 0.0
  %845 = vmatpush2.msra.mxu0 0.0
  %846 = vmatprep.subr.mxu0 0.0
  %847 = vmatpush2.msra.mxu0 0.0
  %848 = vmatprep.subr.mxu0 0.0
  %849 = vmatpush2.msra.mxu0 0.0
  %850 = vmatprep.subr.mxu0 0.0
  %851 = vmatpush2.msra.mxu0 0.0
  %852 = vmatprep.subr.mxu0 0.0
  %853 = vmatpush2.msra.mxu0 0.0
  %854 = vmatprep.subr.mxu0 0.0
  %855 = vmatpush2.msra.mxu0 0.0
  %856 = vmatprep.subr.mxu0 0.0
  %857 = vmatpush2.msra.mxu0 0.0
  %858 = vmatprep.subr.mxu0 0.0
  %859 = vmatpush2.msra.mxu0 0.0
  %860 = vmatprep.subr.mxu0 0.0
  %861 = vmatpush2.msra.mxu0 0.0
  %862 = vmatprep.subr.mxu0 0.0
  %863 = vmatpush2.msra.mxu0 0.0
  %864 = vmatprep.subr.mxu0 0.0
  %865 = vmatpush2.msra.mxu0 0.0
  %866 = vmatprep.subr.mxu0 0.0
  %867 = vmatpush2.msra.mxu0 0.0
  %868 = vmatprep.mubr.f32.mxu0 0.0
  %869 = vmatmul.mubr.f32.gmra.mxu0 %v707
  %v870 = vpop.f32.mrf.mxu0
  %v871 = vadd.f32 %v677, %v870
  %v872 = vpop.f32.mrf.mxu0
  %v873 = vadd.f32 %v679, %v872
  %874 = vmatprep.mubr.f32.mxu0 0.0
  %875 = vmatmul.mubr.f32.gmra.mxu0 %v709
  %v876 = vpop.f32.mrf.mxu0
  %v877 = vadd.f32 %v683, %v876
  %v878 = vpop.f32.mrf.mxu0
  %v879 = vadd.f32 %v685, %v878
  %880 = vmatprep.mubr.f32.mxu0 0.0
  %881 = vmatmul.mubr.f32.gmra.mxu0 %v711
  %v882 = vpop.f32.mrf.mxu0
  %v883 = vadd.f32 %v689, %v882
  %v884 = vpop.f32.mrf.mxu0
  %v885 = vadd.f32 %v691, %v884
  %886 = vmatprep.mubr.f32.mxu0 0.0
  %887 = vmatmul.mubr.f32.gmra.mxu0 %v713
  %v888 = vpop.f32.mrf.mxu0
  %v889 = vadd.f32 %v695, %v888
  %v890 = vpop.f32.mrf.mxu0
  %v891 = vadd.f32 %v697, %v890
  %892 = vdwg.mxu0
  %893 = vrot.lane.b32.xlu0 %v484, 126
  %v894 = vpop.permute.xlu0 %893
  %895 = vrot.lane.b32.xlu0 %v328, 126
  %v896 = vpop.permute.xlu0 %895
  %897 = vrot.lane.b32.xlu0 %v471, 126
  %v898 = vpop.permute.xlu0 %897
  %v899 = vsel %vm56, %v894, %v896
  %v900 = vsel %vm56, %v896, %v898
  %v904 = vsel %vm56, %v898, 0.0
  %905 = vrot.lane.b32.xlu0 %v25, 32
  %v906 = vpop.permute.xlu0 %905
  %907 = vrot.lane.b32.xlu0 %v26, 32
  %v908 = vpop.permute.xlu0 %907
  %909 = vrot.lane.b32.xlu0 %v27, 32
  %v910 = vpop.permute.xlu0 %909
  %911 = vrot.lane.b32.xlu0 %v28, 32
  %v912 = vpop.permute.xlu0 %911
  %v913 = vsel %vm512, %v906, 0
  %v915 = vsel %vm512, %v908, 0
  %v917 = vsel %vm512, %v910, 0
  %v919 = vsel %vm512, %v912, 0
  %921 = vmatprep.subr.mxu0 0.0
  %922 = vmatpush1.msra.mxu0 0.0
  %923 = vmatprep.subr.mxu0 0.0
  %924 = vmatpush1.msra.mxu0 0.0
  %925 = vmatprep.subr.mxu0 0.0
  %926 = vmatpush1.msra.mxu0 0.0
  %927 = vmatprep.subr.mxu0 0.0
  %928 = vmatpush1.msra.mxu0 0.0
  %929 = vmatprep.subr.mxu0 0.0
  %930 = vmatpush1.msra.mxu0 0.0
  %931 = vmatprep.subr.mxu0 0.0
  %932 = vmatpush1.msra.mxu0 0.0
  %933 = vmatprep.subr.mxu0 0.0
  %934 = vmatpush1.msra.mxu0 0.0
  %935 = vmatprep.subr.mxu0 0.0
  %936 = vmatpush1.msra.mxu0 0.0
  %937 = vmatprep.subr.mxu0 0.0
  %938 = vmatpush1.msra.mxu0 0.0
  %939 = vmatprep.subr.mxu0 0.0
  %940 = vmatpush1.msra.mxu0 0.0
  %941 = vmatprep.subr.mxu0 0.0
  %942 = vmatpush1.msra.mxu0 0.0
  %943 = vmatprep.subr.mxu0 0.0
  %944 = vmatpush1.msra.mxu0 0.0
  %945 = vmatprep.subr.mxu0 0.0
  %946 = vmatpush1.msra.mxu0 0.0
  %947 = vmatprep.subr.mxu0 0.0
  %948 = vmatpush1.msra.mxu0 0.0
  %949 = vmatprep.subr.mxu0 0.0
  %950 = vmatpush1.msra.mxu0 0.0
  %951 = vmatprep.subr.mxu0 %v900
  %952 = vmatpush1.msra.mxu0 %v899
  %953 = vmatprep.subr.mxu0 0.0
  %954 = vmatpush2.msra.mxu0 0.0
  %955 = vmatprep.subr.mxu0 0.0
  %956 = vmatpush2.msra.mxu0 0.0
  %957 = vmatprep.subr.mxu0 0.0
  %958 = vmatpush2.msra.mxu0 0.0
  %959 = vmatprep.subr.mxu0 0.0
  %960 = vmatpush2.msra.mxu0 0.0
  %961 = vmatprep.subr.mxu0 0.0
  %962 = vmatpush2.msra.mxu0 0.0
  %963 = vmatprep.subr.mxu0 0.0
  %964 = vmatpush2.msra.mxu0 0.0
  %965 = vmatprep.subr.mxu0 0.0
  %966 = vmatpush2.msra.mxu0 0.0
  %967 = vmatprep.subr.mxu0 0.0
  %968 = vmatpush2.msra.mxu0 0.0
  %969 = vmatprep.subr.mxu0 0.0
  %970 = vmatpush2.msra.mxu0 0.0
  %971 = vmatprep.subr.mxu0 0.0
  %972 = vmatpush2.msra.mxu0 0.0
  %973 = vmatprep.subr.mxu0 0.0
  %974 = vmatpush2.msra.mxu0 0.0
  %975 = vmatprep.subr.mxu0 0.0
  %976 = vmatpush2.msra.mxu0 0.0
  %977 = vmatprep.subr.mxu0 0.0
  %978 = vmatpush2.msra.mxu0 0.0
  %979 = vmatprep.subr.mxu0 0.0
  %980 = vmatpush2.msra.mxu0 0.0
  %981 = vmatprep.subr.mxu0 0.0
  %982 = vmatpush2.msra.mxu0 0.0
  %983 = vmatprep.subr.mxu0 0.0
  %984 = vmatpush2.msra.mxu0 0.0
  %985 = vmatprep.mubr.f32.mxu0 0.0
  %986 = vmatmul.mubr.f32.gmra.mxu0 %v913
  %v987 = vpop.f32.mrf.mxu0
  %v988 = vadd.f32 0.0, %v987
  %v989 = vpop.f32.mrf.mxu0
  %v990 = vadd.f32 0.0, %v989
  %991 = vmatprep.mubr.f32.mxu0 0.0
  %992 = vmatmul.mubr.f32.gmra.mxu0 %v915
  %v993 = vpop.f32.mrf.mxu0
  %v994 = vadd.f32 0.0, %v993
  %v995 = vpop.f32.mrf.mxu0
  %v996 = vadd.f32 0.0, %v995
  %997 = vmatprep.mubr.f32.mxu0 0.0
  %998 = vmatmul.mubr.f32.gmra.mxu0 %v917
  %v999 = vpop.f32.mrf.mxu0
  %v1000 = vadd.f32 0.0, %v999
  %v1001 = vpop.f32.mrf.mxu0
  %v1002 = vadd.f32 0.0, %v1001
  %1003 = vmatprep.mubr.f32.mxu0 0.0
  %1004 = vmatmul.mubr.f32.gmra.mxu0 %v919
  %v1005 = vpop.f32.mrf.mxu0
  %v1006 = vadd.f32 0.0, %v1005
  %v1007 = vpop.f32.mrf.mxu0
  %v1008 = vadd.f32 0.0, %v1007
  %1009 = vdwg.mxu0
  %1010 = vmatprep.subr.mxu0 0.0
  %1011 = vmatpush1.msra.mxu0 0.0
  %1012 = vmatprep.subr.mxu0 0.0
  %1013 = vmatpush1.msra.mxu0 0.0
  %1014 = vmatprep.subr.mxu0 0.0
  %1015 = vmatpush1.msra.mxu0 0.0
  %1016 = vmatprep.subr.mxu0 0.0
  %1017 = vmatpush1.msra.mxu0 0.0
  %1018 = vmatprep.subr.mxu0 0.0
  %1019 = vmatpush1.msra.mxu0 0.0
  %1020 = vmatprep.subr.mxu0 0.0
  %1021 = vmatpush1.msra.mxu0 0.0
  %1022 = vmatprep.subr.mxu0 0.0
  %1023 = vmatpush1.msra.mxu0 0.0
  %1024 = vmatprep.subr.mxu0 0.0
  %1025 = vmatpush1.msra.mxu0 0.0
  %1026 = vmatprep.subr.mxu0 0.0
  %1027 = vmatpush1.msra.mxu0 0.0
  %1028 = vmatprep.subr.mxu0 0.0
  %1029 = vmatpush1.msra.mxu0 0.0
  %1030 = vmatprep.subr.mxu0 0.0
  %1031 = vmatpush1.msra.mxu0 0.0
  %1032 = vmatprep.subr.mxu0 0.0
  %1033 = vmatpush1.msra.mxu0 0.0
  %1034 = vmatprep.subr.mxu0 0.0
  %1035 = vmatpush1.msra.mxu0 0.0
  %1036 = vmatprep.subr.mxu0 0.0
  %1037 = vmatpush1.msra.mxu0 0.0
  %1038 = vmatprep.subr.mxu0 0.0
  %1039 = vmatpush1.msra.mxu0 0.0
  %1040 = vmatprep.subr.mxu0 %v904
  %1041 = vmatpush1.msra.mxu0 %v898
  %1042 = vmatprep.subr.mxu0 0.0
  %1043 = vmatpush2.msra.mxu0 0.0
  %1044 = vmatprep.subr.mxu0 0.0
  %1045 = vmatpush2.msra.mxu0 0.0
  %1046 = vmatprep.subr.mxu0 0.0
  %1047 = vmatpush2.msra.mxu0 0.0
  %1048 = vmatprep.subr.mxu0 0.0
  %1049 = vmatpush2.msra.mxu0 0.0
  %1050 = vmatprep.subr.mxu0 0.0
  %1051 = vmatpush2.msra.mxu0 0.0
  %1052 = vmatprep.subr.mxu0 0.0
  %1053 = vmatpush2.msra.mxu0 0.0
  %1054 = vmatprep.subr.mxu0 0.0
  %1055 = vmatpush2.msra.mxu0 0.0
  %1056 = vmatprep.subr.mxu0 0.0
  %1057 = vmatpush2.msra.mxu0 0.0
  %1058 = vmatprep.subr.mxu0 0.0
  %1059 = vmatpush2.msra.mxu0 0.0
  %1060 = vmatprep.subr.mxu0 0.0
  %1061 = vmatpush2.msra.mxu0 0.0
  %1062 = vmatprep.subr.mxu0 0.0
  %1063 = vmatpush2.msra.mxu0 0.0
  %1064 = vmatprep.subr.mxu0 0.0
  %1065 = vmatpush2.msra.mxu0 0.0
  %1066 = vmatprep.subr.mxu0 0.0
  %1067 = vmatpush2.msra.mxu0 0.0
  %1068 = vmatprep.subr.mxu0 0.0
  %1069 = vmatpush2.msra.mxu0 0.0
  %1070 = vmatprep.subr.mxu0 0.0
  %1071 = vmatpush2.msra.mxu0 0.0
  %1072 = vmatprep.subr.mxu0 0.0
  %1073 = vmatpush2.msra.mxu0 0.0
  %1074 = vmatprep.mubr.f32.mxu0 0.0
  %1075 = vmatmul.mubr.f32.gmra.mxu0 %v913
  %v1076 = vpop.f32.mrf.mxu0
  %v1077 = vadd.f32 0.0, %v1076
  %v1078 = vpop.f32.mrf.mxu0
  %v1079 = vadd.f32 0.0, %v1078
  %1080 = vmatprep.mubr.f32.mxu0 0.0
  %1081 = vmatmul.mubr.f32.gmra.mxu0 %v915
  %v1082 = vpop.f32.mrf.mxu0
  %v1083 = vadd.f32 0.0, %v1082
  %v1084 = vpop.f32.mrf.mxu0
  %v1085 = vadd.f32 0.0, %v1084
  %1086 = vmatprep.mubr.f32.mxu0 0.0
  %1087 = vmatmul.mubr.f32.gmra.mxu0 %v917
  %v1088 = vpop.f32.mrf.mxu0
  %v1089 = vadd.f32 0.0, %v1088
  %v1090 = vpop.f32.mrf.mxu0
  %v1091 = vadd.f32 0.0, %v1090
  %1092 = vmatprep.mubr.f32.mxu0 0.0
  %1093 = vmatmul.mubr.f32.gmra.mxu0 %v919
  %v1094 = vpop.f32.mrf.mxu0
  %v1095 = vadd.f32 0.0, %v1094
  %v1096 = vpop.f32.mrf.mxu0
  %v1097 = vadd.f32 0.0, %v1096
  %1098 = vdwg.mxu0
  %v1099 = vadd.f32 %v782, %v988
  %v1100 = vadd.f32 %v784, %v990
  %v1101 = vadd.f32 %v871, %v1077
  %v1102 = vadd.f32 %v873, %v1079
  %v1103 = vadd.f32 %v788, %v994
  %v1104 = vadd.f32 %v790, %v996
  %v1105 = vadd.f32 %v877, %v1083
  %v1106 = vadd.f32 %v879, %v1085
  %v1107 = vadd.f32 %v794, %v1000
  %v1108 = vadd.f32 %v796, %v1002
  %v1109 = vadd.f32 %v883, %v1089
  %v1110 = vadd.f32 %v885, %v1091
  %v1111 = vadd.f32 %v800, %v1006
  %v1112 = vadd.f32 %v802, %v1008
  %v1113 = vadd.f32 %v889, %v1095
  %v1114 = vadd.f32 %v891, %v1097
  %1115 = vrot.lane.b32.xlu0 %v484, 125
  %v1116 = vpop.permute.xlu0 %1115
  %1117 = vrot.lane.b32.xlu0 %v328, 125
  %v1118 = vpop.permute.xlu0 %1117
  %1119 = vrot.lane.b32.xlu0 %v471, 125
  %v1120 = vpop.permute.xlu0 %1119
  %vm1121 = vcmask 1022976
  %v1122 = vsel %vm1121, %v1116, %v1118
  %v1123 = vsel %vm1121, %v1118, %v1120
  %v1127 = vsel %vm1121, %v1120, 0.0
  %1128 = vrot.lane.b32.xlu0 %v25, 24
  %v1129 = vpop.permute.xlu0 %1128
  %1130 = vrot.lane.b32.xlu0 %v26, 24
  %v1131 = vpop.permute.xlu0 %1130
  %1132 = vrot.lane.b32.xlu0 %v27, 24
  %v1133 = vpop.permute.xlu0 %1132
  %1134 = vrot.lane.b32.xlu0 %v28, 24
  %v1135 = vpop.permute.xlu0 %1134
  %v1136 = vsel %vm512, %v1129, 0
  %v1138 = vsel %vm512, %v1131, 0
  %v1140 = vsel %vm512, %v1133, 0
  %v1142 = vsel %vm512, %v1135, 0
  %1144 = vmatprep.subr.mxu0 0.0
  %1145 = vmatpush1.msra.mxu0 0.0
  %1146 = vmatprep.subr.mxu0 0.0
  %1147 = vmatpush1.msra.mxu0 0.0
  %1148 = vmatprep.subr.mxu0 0.0
  %1149 = vmatpush1.msra.mxu0 0.0
  %1150 = vmatprep.subr.mxu0 0.0
  %1151 = vmatpush1.msra.mxu0 0.0
  %1152 = vmatprep.subr.mxu0 0.0
  %1153 = vmatpush1.msra.mxu0 0.0
  %1154 = vmatprep.subr.mxu0 0.0
  %1155 = vmatpush1.msra.mxu0 0.0
  %1156 = vmatprep.subr.mxu0 0.0
  %1157 = vmatpush1.msra.mxu0 0.0
  %1158 = vmatprep.subr.mxu0 0.0
  %1159 = vmatpush1.msra.mxu0 0.0
  %1160 = vmatprep.subr.mxu0 0.0
  %1161 = vmatpush1.msra.mxu0 0.0
  %1162 = vmatprep.subr.mxu0 0.0
  %1163 = vmatpush1.msra.mxu0 0.0
  %1164 = vmatprep.subr.mxu0 0.0
  %1165 = vmatpush1.msra.mxu0 0.0
  %1166 = vmatprep.subr.mxu0 0.0
  %1167 = vmatpush1.msra.mxu0 0.0
  %1168 = vmatprep.subr.mxu0 0.0
  %1169 = vmatpush1.msra.mxu0 0.0
  %1170 = vmatprep.subr.mxu0 0.0
  %1171 = vmatpush1.msra.mxu0 0.0
  %1172 = vmatprep.subr.mxu0 0.0
  %1173 = vmatpush1.msra.mxu0 0.0
  %1174 = vmatprep.subr.mxu0 %v1123
  %1175 = vmatpush1.msra.mxu0 %v1122
  %1176 = vmatprep.subr.mxu0 0.0
  %1177 = vmatpush2.msra.mxu0 0.0
  %1178 = vmatprep.subr.mxu0 0.0
  %1179 = vmatpush2.msra.mxu0 0.0
  %1180 = vmatprep.subr.mxu0 0.0
  %1181 = vmatpush2.msra.mxu0 0.0
  %1182 = vmatprep.subr.mxu0 0.0
  %1183 = vmatpush2.msra.mxu0 0.0
  %1184 = vmatprep.subr.mxu0 0.0
  %1185 = vmatpush2.msra.mxu0 0.0
  %1186 = vmatprep.subr.mxu0 0.0
  %1187 = vmatpush2.msra.mxu0 0.0
  %1188 = vmatprep.subr.mxu0 0.0
  %1189 = vmatpush2.msra.mxu0 0.0
  %1190 = vmatprep.subr.mxu0 0.0
  %1191 = vmatpush2.msra.mxu0 0.0
  %1192 = vmatprep.subr.mxu0 0.0
  %1193 = vmatpush2.msra.mxu0 0.0
  %1194 = vmatprep.subr.mxu0 0.0
  %1195 = vmatpush2.msra.mxu0 0.0
  %1196 = vmatprep.subr.mxu0 0.0
  %1197 = vmatpush2.msra.mxu0 0.0
  %1198 = vmatprep.subr.mxu0 0.0
  %1199 = vmatpush2.msra.mxu0 0.0
  %1200 = vmatprep.subr.mxu0 0.0
  %1201 = vmatpush2.msra.mxu0 0.0
  %1202 = vmatprep.subr.mxu0 0.0
  %1203 = vmatpush2.msra.mxu0 0.0
  %1204 = vmatprep.subr.mxu0 0.0
  %1205 = vmatpush2.msra.mxu0 0.0
  %1206 = vmatprep.subr.mxu0 0.0
  %1207 = vmatpush2.msra.mxu0 0.0
  %1208 = vmatprep.mubr.f32.mxu0 0.0
  %1209 = vmatmul.mubr.f32.gmra.mxu0 %v1136
  %v1210 = vpop.f32.mrf.mxu0
  %v1211 = vadd.f32 0.0, %v1210
  %v1212 = vpop.f32.mrf.mxu0
  %v1213 = vadd.f32 0.0, %v1212
  %1214 = vmatprep.mubr.f32.mxu0 0.0
  %1215 = vmatmul.mubr.f32.gmra.mxu0 %v1138
  %v1216 = vpop.f32.mrf.mxu0
  %v1217 = vadd.f32 0.0, %v1216
  %v1218 = vpop.f32.mrf.mxu0
  %v1219 = vadd.f32 0.0, %v1218
  %1220 = vmatprep.mubr.f32.mxu0 0.0
  %1221 = vmatmul.mubr.f32.gmra.mxu0 %v1140
  %v1222 = vpop.f32.mrf.mxu0
  %v1223 = vadd.f32 0.0, %v1222
  %v1224 = vpop.f32.mrf.mxu0
  %v1225 = vadd.f32 0.0, %v1224
  %1226 = vmatprep.mubr.f32.mxu0 0.0
  %1227 = vmatmul.mubr.f32.gmra.mxu0 %v1142
  %v1228 = vpop.f32.mrf.mxu0
  %v1229 = vadd.f32 0.0, %v1228
  %v1230 = vpop.f32.mrf.mxu0
  %v1231 = vadd.f32 0.0, %v1230
  %1232 = vdwg.mxu0
  %1233 = vmatprep.subr.mxu0 0.0
  %1234 = vmatpush1.msra.mxu0 0.0
  %1235 = vmatprep.subr.mxu0 0.0
  %1236 = vmatpush1.msra.mxu0 0.0
  %1237 = vmatprep.subr.mxu0 0.0
  %1238 = vmatpush1.msra.mxu0 0.0
  %1239 = vmatprep.subr.mxu0 0.0
  %1240 = vmatpush1.msra.mxu0 0.0
  %1241 = vmatprep.subr.mxu0 0.0
  %1242 = vmatpush1.msra.mxu0 0.0
  %1243 = vmatprep.subr.mxu0 0.0
  %1244 = vmatpush1.msra.mxu0 0.0
  %1245 = vmatprep.subr.mxu0 0.0
  %1246 = vmatpush1.msra.mxu0 0.0
  %1247 = vmatprep.subr.mxu0 0.0
  %1248 = vmatpush1.msra.mxu0 0.0
  %1249 = vmatprep.subr.mxu0 0.0
  %1250 = vmatpush1.msra.mxu0 0.0
  %1251 = vmatprep.subr.mxu0 0.0
  %1252 = vmatpush1.msra.mxu0 0.0
  %1253 = vmatprep.subr.mxu0 0.0
  %1254 = vmatpush1.msra.mxu0 0.0
  %1255 = vmatprep.subr.mxu0 0.0
  %1256 = vmatpush1.msra.mxu0 0.0
  %1257 = vmatprep.subr.mxu0 0.0
  %1258 = vmatpush1.msra.mxu0 0.0
  %1259 = vmatprep.subr.mxu0 0.0
  %1260 = vmatpush1.msra.mxu0 0.0
  %1261 = vmatprep.subr.mxu0 0.0
  %1262 = vmatpush1.msra.mxu0 0.0
  %1263 = vmatprep.subr.mxu0 %v1127
  %1264 = vmatpush1.msra.mxu0 %v1120
  %1265 = vmatprep.subr.mxu0 0.0
  %1266 = vmatpush2.msra.mxu0 0.0
  %1267 = vmatprep.subr.mxu0 0.0
  %1268 = vmatpush2.msra.mxu0 0.0
  %1269 = vmatprep.subr.mxu0 0.0
  %1270 = vmatpush2.msra.mxu0 0.0
  %1271 = vmatprep.subr.mxu0 0.0
  %1272 = vmatpush2.msra.mxu0 0.0
  %1273 = vmatprep.subr.mxu0 0.0
  %1274 = vmatpush2.msra.mxu0 0.0
  %1275 = vmatprep.subr.mxu0 0.0
  %1276 = vmatpush2.msra.mxu0 0.0
  %1277 = vmatprep.subr.mxu0 0.0
  %1278 = vmatpush2.msra.mxu0 0.0
  %1279 = vmatprep.subr.mxu0 0.0
  %1280 = vmatpush2.msra.mxu0 0.0
  %1281 = vmatprep.subr.mxu0 0.0
  %1282 = vmatpush2.msra.mxu0 0.0
  %1283 = vmatprep.subr.mxu0 0.0
  %1284 = vmatpush2.msra.mxu0 0.0
  %1285 = vmatprep.subr.mxu0 0.0
  %1286 = vmatpush2.msra.mxu0 0.0
  %1287 = vmatprep.subr.mxu0 0.0
  %1288 = vmatpush2.msra.mxu0 0.0
  %1289 = vmatprep.subr.mxu0 0.0
  %1290 = vmatpush2.msra.mxu0 0.0
  %1291 = vmatprep.subr.mxu0 0.0
  %1292 = vmatpush2.msra.mxu0 0.0
  %1293 = vmatprep.subr.mxu0 0.0
  %1294 = vmatpush2.msra.mxu0 0.0
  %1295 = vmatprep.subr.mxu0 0.0
  %1296 = vmatpush2.msra.mxu0 0.0
  %1297 = vmatprep.mubr.f32.mxu0 0.0
  %1298 = vmatmul.mubr.f32.gmra.mxu0 %v1136
  %v1299 = vpop.f32.mrf.mxu0
  %v1300 = vadd.f32 0.0, %v1299
  %v1301 = vpop.f32.mrf.mxu0
  %v1302 = vadd.f32 0.0, %v1301
  %1303 = vmatprep.mubr.f32.mxu0 0.0
  %1304 = vmatmul.mubr.f32.gmra.mxu0 %v1138
  %v1305 = vpop.f32.mrf.mxu0
  %v1306 = vadd.f32 0.0, %v1305
  %v1307 = vpop.f32.mrf.mxu0
  %v1308 = vadd.f32 0.0, %v1307
  %1309 = vmatprep.mubr.f32.mxu0 0.0
  %1310 = vmatmul.mubr.f32.gmra.mxu0 %v1140
  %v1311 = vpop.f32.mrf.mxu0
  %v1312 = vadd.f32 0.0, %v1311
  %v1313 = vpop.f32.mrf.mxu0
  %v1314 = vadd.f32 0.0, %v1313
  %1315 = vmatprep.mubr.f32.mxu0 0.0
  %1316 = vmatmul.mubr.f32.gmra.mxu0 %v1142
  %v1317 = vpop.f32.mrf.mxu0
  %v1318 = vadd.f32 0.0, %v1317
  %v1319 = vpop.f32.mrf.mxu0
  %v1320 = vadd.f32 0.0, %v1319
  %1321 = vdwg.mxu0
  %v1322 = vadd.f32 %v1099, %v1211
  %v1323 = vadd.f32 %v1100, %v1213
  %v1324 = vadd.f32 %v1101, %v1300
  %v1325 = vadd.f32 %v1102, %v1302
  %v1326 = vadd.f32 %v1103, %v1217
  %v1327 = vadd.f32 %v1104, %v1219
  %v1328 = vadd.f32 %v1105, %v1306
  %v1329 = vadd.f32 %v1106, %v1308
  %v1330 = vadd.f32 %v1107, %v1223
  %v1331 = vadd.f32 %v1108, %v1225
  %v1332 = vadd.f32 %v1109, %v1312
  %v1333 = vadd.f32 %v1110, %v1314
  %v1334 = vadd.f32 %v1111, %v1229
  %v1335 = vadd.f32 %v1112, %v1231
  %v1336 = vadd.f32 %v1113, %v1318
  %v1337 = vadd.f32 %v1114, %v1320
  %1338 = vset.pattern.permute.xlu0 112
  %1339 = vperm.xlu0 %1338, %v25
  %v1340 = vpop.permute.xlu0 %1339
  %1342 = vset.pattern.permute.xlu0 112
  %1343 = vperm.xlu0 %1342, %v26
  %v1344 = vpop.permute.xlu0 %1343
  %1346 = vset.pattern.permute.xlu0 112
  %1347 = vperm.xlu0 %1346, %v27
  %v1348 = vpop.permute.xlu0 %1347
  %1350 = vset.pattern.permute.xlu0 112
  %1351 = vperm.xlu0 %1350, %v28
  %v1352 = vpop.permute.xlu0 %1351
  %v1354 = vadd.f32 %v1322, %v1340
  %v1355 = vadd.f32 %v1323, %v1340
  %v1356 = vadd.f32 %v1324, %v1340
  %v1357 = vadd.f32 %v1325, %v1340
  %v1358 = vadd.f32 %v1326, %v1344
  %v1359 = vadd.f32 %v1327, %v1344
  %v1360 = vadd.f32 %v1328, %v1344
  %v1361 = vadd.f32 %v1329, %v1344
  %v1362 = vadd.f32 %v1330, %v1348
  %v1363 = vadd.f32 %v1331, %v1348
  %v1364 = vadd.f32 %v1332, %v1348
  %v1365 = vadd.f32 %v1333, %v1348
  %v1366 = vadd.f32 %v1334, %v1352
  %v1367 = vadd.f32 %v1335, %v1352
  %v1368 = vadd.f32 %v1336, %v1352
  %v1369 = vadd.f32 %v1337, %v1352
  %v1370 = vmax.f32 %v1354, 0.0
  %v1371 = vmax.f32 %v1355, 0.0
  %v1372 = vmax.f32 %v1356, 0.0
  %v1373 = vmax.f32 %v1357, 0.0
  %v1374 = vmax.f32 %v1358, 0.0
  %v1375 = vmax.f32 %v1359, 0.0
  %v1376 = vmax.f32 %v1360, 0.0
  %v1377 = vmax.f32 %v1361, 0.0
  %v1378 = vmax.f32 %v1362, 0.0
  %v1379 = vmax.f32 %v1363, 0.0
  %v1380 = vmax.f32 %v1364, 0.0
  %v1381 = vmax.f32 %v1365, 0.0
  %v1382 = vmax.f32 %v1366, 0.0
  %v1383 = vmax.f32 %v1367, 0.0
  %v1384 = vmax.f32 %v1368, 0.0
  %v1385 = vmax.f32 %v1369, 0.0
  %1402 = vrot.lane.b32.xlu0 %v1370, 127
  %v1403 = vpop.permute.xlu0 %1402
  %1404 = vrot.lane.b32.xlu0 %v1371, 127
  %v1405 = vpop.permute.xlu0 %1404
  %1406 = vrot.lane.b32.xlu0 %v1372, 127
  %v1407 = vpop.permute.xlu0 %1406
  %1408 = vrot.lane.b32.xlu0 %v1373, 127
  %v1409 = vpop.permute.xlu0 %1408
  %1410 = vrot.lane.b32.xlu0 %v1374, 127
  %v1411 = vpop.permute.xlu0 %1410
  %1412 = vrot.lane.b32.xlu0 %v1375, 127
  %v1413 = vpop.permute.xlu0 %1412
  %1414 = vrot.lane.b32.xlu0 %v1376, 127
  %v1415 = vpop.permute.xlu0 %1414
  %1416 = vrot.lane.b32.xlu0 %v1377, 127
  %v1417 = vpop.permute.xlu0 %1416
  %1418 = vrot.lane.b32.xlu0 %v1378, 127
  %v1419 = vpop.permute.xlu0 %1418
  %1420 = vrot.lane.b32.xlu0 %v1379, 127
  %v1421 = vpop.permute.xlu0 %1420
  %1422 = vrot.lane.b32.xlu0 %v1380, 127
  %v1423 = vpop.permute.xlu0 %1422
  %1424 = vrot.lane.b32.xlu0 %v1381, 127
  %v1425 = vpop.permute.xlu0 %1424
  %1426 = vrot.lane.b32.xlu0 %v1382, 127
  %v1427 = vpop.permute.xlu0 %1426
  %1428 = vrot.lane.b32.xlu0 %v1383, 127
  %v1429 = vpop.permute.xlu0 %1428
  %1430 = vrot.lane.b32.xlu0 %v1384, 127
  %v1431 = vpop.permute.xlu0 %1430
  %1432 = vrot.lane.b32.xlu0 %v1385, 127
  %v1433 = vpop.permute.xlu0 %1432
  %v1434 = vsel %vm39, %v1403, %v1405
  %v1435 = vsel %vm39, %v1405, %v1407
  %v1436 = vsel %vm39, %v1407, %v1409
  %v1437 = vsel %vm39, %v1411, %v1413
  %v1438 = vsel %vm39, %v1413, %v1415
  %v1439 = vsel %vm39, %v1415, %v1417
  %v1440 = vsel %vm39, %v1419, %v1421
  %v1441 = vsel %vm39, %v1421, %v1423
  %v1442 = vsel %vm39, %v1423, %v1425
  %v1443 = vsel %vm39, %v1427, %v1429
  %v1444 = vsel %vm39, %v1429, %v1431
  %v1445 = vsel %vm39, %v1431, %v1433
  %v1462 = vsel %vm39, %v1409, 0.0
  %v1463 = vsel %vm39, %v1417, 0.0
  %v1464 = vsel %vm39, %v1425, 0.0
  %v1465 = vsel %vm39, %v1433, 0.0
  %v1466 = vmax.f32 %v1370, %v1434
  %v1467 = vmax.f32 %v1371, %v1435
  %v1468 = vmax.f32 %v1372, %v1436
  %v1469 = vmax.f32 %v1373, %v1462
  %v1470 = vmax.f32 %v1374, %v1437
  %v1471 = vmax.f32 %v1375, %v1438
  %v1472 = vmax.f32 %v1376, %v1439
  %v1473 = vmax.f32 %v1377, %v1463
  %v1474 = vmax.f32 %v1378, %v1440
  %v1475 = vmax.f32 %v1379, %v1441
  %v1476 = vmax.f32 %v1380, %v1442
  %v1477 = vmax.f32 %v1381, %v1464
  %v1478 = vmax.f32 %v1382, %v1443
  %v1479 = vmax.f32 %v1383, %v1444
  %v1480 = vmax.f32 %v1384, %v1445
  %v1481 = vmax.f32 %v1385, %v1465
  %1498 = vrot.lane.b32.xlu0 %v1466, 126
  %v1499 = vpop.permute.xlu0 %1498
  %1500 = vrot.lane.b32.xlu0 %v1467, 126
  %v1501 = vpop.permute.xlu0 %1500
  %1502 = vrot.lane.b32.xlu0 %v1468, 126
  %v1503 = vpop.permute.xlu0 %1502
  %1504 = vrot.lane.b32.xlu0 %v1469, 126
  %v1505 = vpop.permute.xlu0 %1504
  %1506 = vrot.lane.b32.xlu0 %v1470, 126
  %v1507 = vpop.permute.xlu0 %1506
  %1508 = vrot.lane.b32.xlu0 %v1471, 126
  %v1509 = vpop.permute.xlu0 %1508
  %1510 = vrot.lane.b32.xlu0 %v1472, 126
  %v1511 = vpop.permute.xlu0 %1510
  %1512 = vrot.lane.b32.xlu0 %v1473, 126
  %v1513 = vpop.permute.xlu0 %1512
  %1514 = vrot.lane.b32.xlu0 %v1474, 126
  %v1515 = vpop.permute.xlu0 %1514
  %1516 = vrot.lane.b32.xlu0 %v1475, 126
  %v1517 = vpop.permute.xlu0 %1516
  %1518 = vrot.lane.b32.xlu0 %v1476, 126
  %v1519 = vpop.permute.xlu0 %1518
  %1520 = vrot.lane.b32.xlu0 %v1477, 126
  %v1521 = vpop.permute.xlu0 %1520
  %1522 = vrot.lane.b32.xlu0 %v1478, 126
  %v1523 = vpop.permute.xlu0 %1522
  %1524 = vrot.lane.b32.xlu0 %v1479, 126
  %v1525 = vpop.permute.xlu0 %1524
  %1526 = vrot.lane.b32.xlu0 %v1480, 126
  %v1527 = vpop.permute.xlu0 %1526
  %1528 = vrot.lane.b32.xlu0 %v1481, 126
  %v1529 = vpop.permute.xlu0 %1528
  %v1530 = vsel %vm56, %v1499, %v1501
  %v1531 = vsel %vm56, %v1501, %v1503
  %v1532 = vsel %vm56, %v1503, %v1505
  %v1533 = vsel %vm56, %v1507, %v1509
  %v1534 = vsel %vm56, %v1509, %v1511
  %v1535 = vsel %vm56, %v1511, %v1513
  %v1536 = vsel %vm56, %v1515, %v1517
  %v1537 = vsel %vm56, %v1517, %v1519
  %v1538 = vsel %vm56, %v1519, %v1521
  %v1539 = vsel %vm56, %v1523, %v1525
  %v1540 = vsel %vm56, %v1525, %v1527
  %v1541 = vsel %vm56, %v1527, %v1529
  %v1558 = vsel %vm56, %v1505, 0.0
  %v1559 = vsel %vm56, %v1513, 0.0
  %v1560 = vsel %vm56, %v1521, 0.0
  %v1561 = vsel %vm56, %v1529, 0.0
  %1562 = vrot.lane.b32.xlu0 %v1466, 124
  %v1563 = vpop.permute.xlu0 %1562
  %1564 = vrot.lane.b32.xlu0 %v1467, 124
  %v1565 = vpop.permute.xlu0 %1564
  %1566 = vrot.lane.b32.xlu0 %v1468, 124
  %v1567 = vpop.permute.xlu0 %1566
  %1568 = vrot.lane.b32.xlu0 %v1469, 124
  %v1569 = vpop.permute.xlu0 %1568
  %1570 = vrot.lane.b32.xlu0 %v1470, 124
  %v1571 = vpop.permute.xlu0 %1570
  %1572 = vrot.lane.b32.xlu0 %v1471, 124
  %v1573 = vpop.permute.xlu0 %1572
  %1574 = vrot.lane.b32.xlu0 %v1472, 124
  %v1575 = vpop.permute.xlu0 %1574
  %1576 = vrot.lane.b32.xlu0 %v1473, 124
  %v1577 = vpop.permute.xlu0 %1576
  %1578 = vrot.lane.b32.xlu0 %v1474, 124
  %v1579 = vpop.permute.xlu0 %1578
  %1580 = vrot.lane.b32.xlu0 %v1475, 124
  %v1581 = vpop.permute.xlu0 %1580
  %1582 = vrot.lane.b32.xlu0 %v1476, 124
  %v1583 = vpop.permute.xlu0 %1582
  %1584 = vrot.lane.b32.xlu0 %v1477, 124
  %v1585 = vpop.permute.xlu0 %1584
  %1586 = vrot.lane.b32.xlu0 %v1478, 124
  %v1587 = vpop.permute.xlu0 %1586
  %1588 = vrot.lane.b32.xlu0 %v1479, 124
  %v1589 = vpop.permute.xlu0 %1588
  %1590 = vrot.lane.b32.xlu0 %v1480, 124
  %v1591 = vpop.permute.xlu0 %1590
  %1592 = vrot.lane.b32.xlu0 %v1481, 124
  %v1593 = vpop.permute.xlu0 %1592
  %vm1594 = vcmask 1014784
  %v1595 = vsel %vm1594, %v1563, %v1565
  %v1596 = vsel %vm1594, %v1565, %v1567
  %v1597 = vsel %vm1594, %v1567, %v1569
  %v1598 = vsel %vm1594, %v1571, %v1573
  %v1599 = vsel %vm1594, %v1573, %v1575
  %v1600 = vsel %vm1594, %v1575, %v1577
  %v1601 = vsel %vm1594, %v1579, %v1581
  %v1602 = vsel %vm1594, %v1581, %v1583
  %v1603 = vsel %vm1594, %v1583, %v1585
  %v1604 = vsel %vm1594, %v1587, %v1589
  %v1605 = vsel %vm1594, %v1589, %v1591
  %v1606 = vsel %vm1594, %v1591, %v1593
  %v1623 = vsel %vm1594, %v1569, 0.0
  %v1624 = vsel %vm1594, %v1577, 0.0
  %v1625 = vsel %vm1594, %v1585, 0.0
  %v1626 = vsel %vm1594, %v1593, 0.0
  %1627 = vrot.lane.b32.xlu0 %v1466, 122
  %v1628 = vpop.permute.xlu0 %1627
  %1629 = vrot.lane.b32.xlu0 %v1467, 122
  %v1630 = vpop.permute.xlu0 %1629
  %1631 = vrot.lane.b32.xlu0 %v1468, 122
  %v1632 = vpop.permute.xlu0 %1631
  %1633 = vrot.lane.b32.xlu0 %v1469, 122
  %v1634 = vpop.permute.xlu0 %1633
  %1635 = vrot.lane.b32.xlu0 %v1470, 122
  %v1636 = vpop.permute.xlu0 %1635
  %1637 = vrot.lane.b32.xlu0 %v1471, 122
  %v1638 = vpop.permute.xlu0 %1637
  %1639 = vrot.lane.b32.xlu0 %v1472, 122
  %v1640 = vpop.permute.xlu0 %1639
  %1641 = vrot.lane.b32.xlu0 %v1473, 122
  %v1642 = vpop.permute.xlu0 %1641
  %1643 = vrot.lane.b32.xlu0 %v1474, 122
  %v1644 = vpop.permute.xlu0 %1643
  %1645 = vrot.lane.b32.xlu0 %v1475, 122
  %v1646 = vpop.permute.xlu0 %1645
  %1647 = vrot.lane.b32.xlu0 %v1476, 122
  %v1648 = vpop.permute.xlu0 %1647
  %1649 = vrot.lane.b32.xlu0 %v1477, 122
  %v1650 = vpop.permute.xlu0 %1649
  %1651 = vrot.lane.b32.xlu0 %v1478, 122
  %v1652 = vpop.permute.xlu0 %1651
  %1653 = vrot.lane.b32.xlu0 %v1479, 122
  %v1654 = vpop.permute.xlu0 %1653
  %1655 = vrot.lane.b32.xlu0 %v1480, 122
  %v1656 = vpop.permute.xlu0 %1655
  %1657 = vrot.lane.b32.xlu0 %v1481, 122
  %v1658 = vpop.permute.xlu0 %1657
  %vm1659 = vcmask 998400
  %v1660 = vsel %vm1659, %v1628, %v1630
  %v1661 = vsel %vm1659, %v1630, %v1632
  %v1662 = vsel %vm1659, %v1632, %v1634
  %v1663 = vsel %vm1659, %v1636, %v1638
  %v1664 = vsel %vm1659, %v1638, %v1640
  %v1665 = vsel %vm1659, %v1640, %v1642
  %v1666 = vsel %vm1659, %v1644, %v1646
  %v1667 = vsel %vm1659, %v1646, %v1648
  %v1668 = vsel %vm1659, %v1648, %v1650
  %v1669 = vsel %vm1659, %v1652, %v1654
  %v1670 = vsel %vm1659, %v1654, %v1656
  %v1671 = vsel %vm1659, %v1656, %v1658
  %v1688 = vsel %vm1659, %v1634, 0.0
  %v1689 = vsel %vm1659, %v1642, 0.0
  %v1690 = vsel %vm1659, %v1650, 0.0
  %v1691 = vsel %vm1659, %v1658, 0.0
  %1692 = vset.pattern.permute.xlu0 113
  %1693 = vperm.xlu0 %1692, %v25
  %v1694 = vpop.permute.xlu0 %1693
  %1696 = vset.pattern.permute.xlu0 113
  %1697 = vperm.xlu0 %1696, %v26
  %v1698 = vpop.permute.xlu0 %1697
  %1700 = vset.pattern.permute.xlu0 113
  %1701 = vperm.xlu0 %1700, %v27
  %v1702 = vpop.permute.xlu0 %1701
  %1704 = vset.pattern.permute.xlu0 113
  %1705 = vperm.xlu0 %1704, %v28
  %v1706 = vpop.permute.xlu0 %1705
  %1709 = vset.pattern.permute.xlu0 113
  %1710 = vperm.xlu0 %1709, %v29
  %v1711 = vpop.permute.xlu0 %1710
  %1713 = vmatprep.subr.mxu0 %v1670
  %1714 = vmatpush1.msra.mxu0 %v1669
  %1715 = vmatprep.subr.mxu0 %v1667
  %1716 = vmatpush1.msra.mxu0 %v1666
  %1717 = vmatprep.subr.mxu0 %v1664
  %1718 = vmatpush1.msra.mxu0 %v1663
  %1719 = vmatprep.subr.mxu0 %v1661
  %1720 = vmatpush1.msra.mxu0 %v1660
  %1721 = vmatprep.subr.mxu0 %v1605
  %1722 = vmatpush1.msra.mxu0 %v1604
  %1723 = vmatprep.subr.mxu0 %v1602
  %1724 = vmatpush1.msra.mxu0 %v1601
  %1725 = vmatprep.subr.mxu0 %v1599
  %1726 = vmatpush1.msra.mxu0 %v1598
  %1727 = vmatprep.subr.mxu0 %v1596
  %1728 = vmatpush1.msra.mxu0 %v1595
  %1729 = vmatprep.subr.mxu0 %v1540
  %1730 = vmatpush1.msra.mxu0 %v1539
  %1731 = vmatprep.subr.mxu0 %v1537
  %1732 = vmatpush1.msra.mxu0 %v1536
  %1733 = vmatprep.subr.mxu0 %v1534
  %1734 = vmatpush1.msra.mxu0 %v1533
  %1735 = vmatprep.subr.mxu0 %v1531
  %1736 = vmatpush1.msra.mxu0 %v1530
  %1737 = vmatprep.subr.mxu0 %v1479
  %1738 = vmatpush1.msra.mxu0 %v1478
  %1739 = vmatprep.subr.mxu0 %v1475
  %1740 = vmatpush1.msra.mxu0 %v1474
  %1741 = vmatprep.subr.mxu0 %v1471
  %1742 = vmatpush1.msra.mxu0 %v1470
  %1743 = vmatprep.subr.mxu0 %v1467
  %1744 = vmatpush1.msra.mxu0 %v1466
  %1745 = vmatprep.subr.mxu0 0.0
  %1746 = vmatpush2.msra.mxu0 0.0
  %1747 = vmatprep.subr.mxu0 0.0
  %1748 = vmatpush2.msra.mxu0 0.0
  %1749 = vmatprep.subr.mxu0 0.0
  %1750 = vmatpush2.msra.mxu0 0.0
  %1751 = vmatprep.subr.mxu0 0.0
  %1752 = vmatpush2.msra.mxu0 0.0
  %1753 = vmatprep.subr.mxu0 0.0
  %1754 = vmatpush2.msra.mxu0 0.0
  %1755 = vmatprep.subr.mxu0 0.0
  %1756 = vmatpush2.msra.mxu0 0.0
  %1757 = vmatprep.subr.mxu0 0.0
  %1758 = vmatpush2.msra.mxu0 0.0
  %1759 = vmatprep.subr.mxu0 0.0
  %1760 = vmatpush2.msra.mxu0 0.0
  %1761 = vmatprep.subr.mxu0 0.0
  %1762 = vmatpush2.msra.mxu0 0.0
  %1763 = vmatprep.subr.mxu0 0.0
  %1764 = vmatpush2.msra.mxu0 0.0
  %1765 = vmatprep.subr.mxu0 0.0
  %1766 = vmatpush2.msra.mxu0 0.0
  %1767 = vmatprep.subr.mxu0 0.0
  %1768 = vmatpush2.msra.mxu0 0.0
  %1769 = vmatprep.subr.mxu0 0.0
  %1770 = vmatpush2.msra.mxu0 0.0
  %1771 = vmatprep.subr.mxu0 0.0
  %1772 = vmatpush2.msra.mxu0 0.0
  %1773 = vmatprep.subr.mxu0 0.0
  %1774 = vmatpush2.msra.mxu0 0.0
  %1775 = vmatprep.subr.mxu0 0.0
  %1776 = vmatpush2.msra.mxu0 0.0
  %1777 = vmatprep.mubr.f32.mxu0 0.0
  %1778 = vmatmul.mubr.f32.gmra.mxu0 %v20
  %v1779 = vpop.f32.mrf.mxu0
  %v1780 = vadd.f32 %v1694, %v1779
  %v1781 = vpop.f32.mrf.mxu0
  %v1782 = vadd.f32 %v1694, %v1781
  %1783 = vmatprep.mubr.f32.mxu0 0.0
  %1784 = vmatmul.mubr.f32.gmra.mxu0 %v21
  %v1785 = vpop.f32.mrf.mxu0
  %v1786 = vadd.f32 %v1698, %v1785
  %v1787 = vpop.f32.mrf.mxu0
  %v1788 = vadd.f32 %v1698, %v1787
  %1789 = vmatprep.mubr.f32.mxu0 0.0
  %1790 = vmatmul.mubr.f32.gmra.mxu0 %v22
  %v1791 = vpop.f32.mrf.mxu0
  %v1792 = vadd.f32 %v1702, %v1791
  %v1793 = vpop.f32.mrf.mxu0
  %v1794 = vadd.f32 %v1702, %v1793
  %1795 = vmatprep.mubr.f32.mxu0 0.0
  %1796 = vmatmul.mubr.f32.gmra.mxu0 %v23
  %v1797 = vpop.f32.mrf.mxu0
  %v1798 = vadd.f32 %v1706, %v1797
  %v1799 = vpop.f32.mrf.mxu0
  %v1800 = vadd.f32 %v1706, %v1799
  %1801 = vmatprep.mubr.f32.mxu0 0.0
  %1802 = vmatmul.mubr.f32.gmra.mxu0 %v24
  %v1803 = vpop.f32.mrf.mxu0
  %v1804 = vadd.f32 %v1711, %v1803
  %v1805 = vpop.f32.mrf.mxu0
  %v1806 = vadd.f32 %v1711, %v1805
  %1807 = vdwg.mxu0
  %1808 = vmatprep.subr.mxu0 %v1691
  %1809 = vmatpush1.msra.mxu0 %v1671
  %1810 = vmatprep.subr.mxu0 %v1690
  %1811 = vmatpush1.msra.mxu0 %v1668
  %1812 = vmatprep.subr.mxu0 %v1689
  %1813 = vmatpush1.msra.mxu0 %v1665
  %1814 = vmatprep.subr.mxu0 %v1688
  %1815 = vmatpush1.msra.mxu0 %v1662
  %1816 = vmatprep.subr.mxu0 %v1626
  %1817 = vmatpush1.msra.mxu0 %v1606
  %1818 = vmatprep.subr.mxu0 %v1625
  %1819 = vmatpush1.msra.mxu0 %v1603
  %1820 = vmatprep.subr.mxu0 %v1624
  %1821 = vmatpush1.msra.mxu0 %v1600
  %1822 = vmatprep.subr.mxu0 %v1623
  %1823 = vmatpush1.msra.mxu0 %v1597
  %1824 = vmatprep.subr.mxu0 %v1561
  %1825 = vmatpush1.msra.mxu0 %v1541
  %1826 = vmatprep.subr.mxu0 %v1560
  %1827 = vmatpush1.msra.mxu0 %v1538
  %1828 = vmatprep.subr.mxu0 %v1559
  %1829 = vmatpush1.msra.mxu0 %v1535
  %1830 = vmatprep.subr.mxu0 %v1558
  %1831 = vmatpush1.msra.mxu0 %v1532
  %1832 = vmatprep.subr.mxu0 %v1481
  %1833 = vmatpush1.msra.mxu0 %v1480
  %1834 = vmatprep.subr.mxu0 %v1477
  %1835 = vmatpush1.msra.mxu0 %v1476
  %1836 = vmatprep.subr.mxu0 %v1473
  %1837 = vmatpush1.msra.mxu0 %v1472
  %1838 = vmatprep.subr.mxu0 %v1469
  %1839 = vmatpush1.msra.mxu0 %v1468
  %1840 = vmatprep.subr.mxu0 0.0
  %1841 = vmatpush2.msra.mxu0 0.0
  %1842 = vmatprep.subr.mxu0 0.0
  %1843 = vmatpush2.msra.mxu0 0.0
  %1844 = vmatprep.subr.mxu0 0.0
  %1845 = vmatpush2.msra.mxu0 0.0
  %1846 = vmatprep.subr.mxu0 0.0
  %1847 = vmatpush2.msra.mxu0 0.0
  %1848 = vmatprep.subr.mxu0 0.0
  %1849 = vmatpush2.msra.mxu0 0.0
  %1850 = vmatprep.subr.mxu0 0.0
  %1851 = vmatpush2.msra.mxu0 0.0
  %1852 = vmatprep.subr.mxu0 0.0
  %1853 = vmatpush2.msra.mxu0 0.0
  %1854 = vmatprep.subr.mxu0 0.0
  %1855 = vmatpush2.msra.mxu0 0.0
  %1856 = vmatprep.subr.mxu0 0.0
  %1857 = vmatpush2.msra.mxu0 0.0
  %1858 = vmatprep.subr.mxu0 0.0
  %1859 = vmatpush2.msra.mxu0 0.0
  %1860 = vmatprep.subr.mxu0 0.0
  %1861 = vmatpush2.msra.mxu0 0.0
  %1862 = vmatprep.subr.mxu0 0.0
  %1863 = vmatpush2.msra.mxu0 0.0
  %1864 = vmatprep.subr.mxu0 0.0
  %1865 = vmatpush2.msra.mxu0 0.0
  %1866 = vmatprep.subr.mxu0 0.0
  %1867 = vmatpush2.msra.mxu0 0.0
  %1868 = vmatprep.subr.mxu0 0.0
  %1869 = vmatpush2.msra.mxu0 0.0
  %1870 = vmatprep.subr.mxu0 0.0
  %1871 = vmatpush2.msra.mxu0 0.0
  %1872 = vmatprep.mubr.f32.mxu0 0.0
  %1873 = vmatmul.mubr.f32.gmra.mxu0 %v20
  %v1874 = vpop.f32.mrf.mxu0
  %v1875 = vadd.f32 %v1694, %v1874
  %v1876 = vpop.f32.mrf.mxu0
  %v1877 = vadd.f32 %v1694, %v1876
  %1878 = vmatprep.mubr.f32.mxu0 0.0
  %1879 = vmatmul.mubr.f32.gmra.mxu0 %v21
  %v1880 = vpop.f32.mrf.mxu0
  %v1881 = vadd.f32 %v1698, %v1880
  %v1882 = vpop.f32.mrf.mxu0
  %v1883 = vadd.f32 %v1698, %v1882
  %1884 = vmatprep.mubr.f32.mxu0 0.0
  %1885 = vmatmul.mubr.f32.gmra.mxu0 %v22
  %v1886 = vpop.f32.mrf.mxu0
  %v1887 = vadd.f32 %v1702, %v1886
  %v1888 = vpop.f32.mrf.mxu0
  %v1889 = vadd.f32 %v1702, %v1888
  %1890 = vmatprep.mubr.f32.mxu0 0.0
  %1891 = vmatmul.mubr.f32.gmra.mxu0 %v23
  %v1892 = vpop.f32.mrf.mxu0
  %v1893 = vadd.f32 %v1706, %v1892
  %v1894 = vpop.f32.mrf.mxu0
  %v1895 = vadd.f32 %v1706, %v1894
  %1896 = vmatprep.mubr.f32.mxu0 0.0
  %1897 = vmatmul.mubr.f32.gmra.mxu0 %v24
  %v1898 = vpop.f32.mrf.mxu0
  %v1899 = vadd.f32 %v1711, %v1898
  %v1900 = vpop.f32.mrf.mxu0
  %v1901 = vadd.f32 %v1711, %v1900
  %1902 = vdwg.mxu0
  %v1903 = vmax.f32 %v1780, 0.0
  %v1904 = vmax.f32 %v1782, 0.0
  %v1905 = vmax.f32 %v1875, 0.0
  %v1906 = vmax.f32 %v1877, 0.0
  %v1907 = vmax.f32 %v1786, 0.0
  %v1908 = vmax.f32 %v1788, 0.0
  %v1909 = vmax.f32 %v1881, 0.0
  %v1910 = vmax.f32 %v1883, 0.0
  %v1911 = vmax.f32 %v1792, 0.0
  %v1912 = vmax.f32 %v1794, 0.0
  %v1913 = vmax.f32 %v1887, 0.0
  %v1914 = vmax.f32 %v1889, 0.0
  %v1915 = vmax.f32 %v1798, 0.0
  %v1916 = vmax.f32 %v1800, 0.0
  %v1917 = vmax.f32 %v1893, 0.0
  %v1918 = vmax.f32 %v1895, 0.0
  %v1919 = vmax.f32 %v1804, 0.0
  %v1920 = vmax.f32 %v1806, 0.0
  %v1921 = vmax.f32 %v1899, 0.0
  %v1922 = vmax.f32 %v1901, 0.0
  %1943 = vrot.lane.b32.xlu0 %v1903, 126
  %v1944 = vpop.permute.xlu0 %1943
  %1945 = vrot.lane.b32.xlu0 %v1904, 126
  %v1946 = vpop.permute.xlu0 %1945
  %1947 = vrot.lane.b32.xlu0 %v1905, 126
  %v1948 = vpop.permute.xlu0 %1947
  %1949 = vrot.lane.b32.xlu0 %v1906, 126
  %v1950 = vpop.permute.xlu0 %1949
  %1951 = vrot.lane.b32.xlu0 %v1907, 126
  %v1952 = vpop.permute.xlu0 %1951
  %1953 = vrot.lane.b32.xlu0 %v1908, 126
  %v1954 = vpop.permute.xlu0 %1953
  %1955 = vrot.lane.b32.xlu0 %v1909, 126
  %v1956 = vpop.permute.xlu0 %1955
  %1957 = vrot.lane.b32.xlu0 %v1910, 126
  %v1958 = vpop.permute.xlu0 %1957
  %1959 = vrot.lane.b32.xlu0 %v1911, 126
  %v1960 = vpop.permute.xlu0 %1959
  %1961 = vrot.lane.b32.xlu0 %v1912, 126
  %v1962 = vpop.permute.xlu0 %1961
  %1963 = vrot.lane.b32.xlu0 %v1913, 126
  %v1964 = vpop.permute.xlu0 %1963
  %1965 = vrot.lane.b32.xlu0 %v1914, 126
  %v1966 = vpop.permute.xlu0 %1965
  %1967 = vrot.lane.b32.xlu0 %v1915, 126
  %v1968 = vpop.permute.xlu0 %1967
  %1969 = vrot.lane.b32.xlu0 %v1916, 126
  %v1970 = vpop.permute.xlu0 %1969
  %1971 = vrot.lane.b32.xlu0 %v1917, 126
  %v1972 = vpop.permute.xlu0 %1971
  %1973 = vrot.lane.b32.xlu0 %v1918, 126
  %v1974 = vpop.permute.xlu0 %1973
  %1975 = vrot.lane.b32.xlu0 %v1919, 126
  %v1976 = vpop.permute.xlu0 %1975
  %1977 = vrot.lane.b32.xlu0 %v1920, 126
  %v1978 = vpop.permute.xlu0 %1977
  %1979 = vrot.lane.b32.xlu0 %v1921, 126
  %v1980 = vpop.permute.xlu0 %1979
  %1981 = vrot.lane.b32.xlu0 %v1922, 126
  %v1982 = vpop.permute.xlu0 %1981
  %v1983 = vsel %vm56, %v1944, %v1946
  %v1984 = vsel %vm56, %v1946, %v1948
  %v1985 = vsel %vm56, %v1948, %v1950
  %v1986 = vsel %vm56, %v1952, %v1954
  %v1987 = vsel %vm56, %v1954, %v1956
  %v1988 = vsel %vm56, %v1956, %v1958
  %v1989 = vsel %vm56, %v1960, %v1962
  %v1990 = vsel %vm56, %v1962, %v1964
  %v1991 = vsel %vm56, %v1964, %v1966
  %v1992 = vsel %vm56, %v1968, %v1970
  %v1993 = vsel %vm56, %v1970, %v1972
  %v1994 = vsel %vm56, %v1972, %v1974
  %v1995 = vsel %vm56, %v1976, %v1978
  %v1996 = vsel %vm56, %v1978, %v1980
  %v1997 = vsel %vm56, %v1980, %v1982
  %v2018 = vsel %vm56, %v1950, 0.0
  %v2019 = vsel %vm56, %v1958, 0.0
  %v2020 = vsel %vm56, %v1966, 0.0
  %v2021 = vsel %vm56, %v1974, 0.0
  %v2022 = vsel %vm56, %v1982, 0.0
  %v2023 = vmax.f32 %v1903, %v1983
  %v2024 = vmax.f32 %v1904, %v1984
  %v2025 = vmax.f32 %v1905, %v1985
  %v2026 = vmax.f32 %v1906, %v2018
  %v2027 = vmax.f32 %v1907, %v1986
  %v2028 = vmax.f32 %v1908, %v1987
  %v2029 = vmax.f32 %v1909, %v1988
  %v2030 = vmax.f32 %v1910, %v2019
  %v2031 = vmax.f32 %v1911, %v1989
  %v2032 = vmax.f32 %v1912, %v1990
  %v2033 = vmax.f32 %v1913, %v1991
  %v2034 = vmax.f32 %v1914, %v2020
  %v2035 = vmax.f32 %v1915, %v1992
  %v2036 = vmax.f32 %v1916, %v1993
  %v2037 = vmax.f32 %v1917, %v1994
  %v2038 = vmax.f32 %v1918, %v2021
  %v2039 = vmax.f32 %v1919, %v1995
  %v2040 = vmax.f32 %v1920, %v1996
  %v2041 = vmax.f32 %v1921, %v1997
  %v2042 = vmax.f32 %v1922, %v2022
  %v2043 = vld [vmem:[%s3] sm:$0xff]
  %v2044 = vld [vmem:[%s3 + $0x8] sm:$0xff]
  %v2045 = vld [vmem:[%s3 + $0x10] sm:$0xff]
  %v2046 = vld [vmem:[%s3 + $0x18] sm:$0xff]
  %v2047 = vld [vmem:[%s3 + $0x20] sm:$0xff]
  %v2048 = vld [vmem:[%s3 + $0x28] sm:$0xff]
  %v2049 = vld [vmem:[%s3 + $0x30] sm:$0xff]
  %v2050 = vld [vmem:[%s3 + $0x38] sm:$0xff]
  %v2051 = vld [vmem:[%s3 + $0x40] sm:$0xff]
  %v2052 = vld [vmem:[%s3 + $0x48] sm:$0xff]
  %v2053 = vld [vmem:[%s3 + $0x50] sm:$0xff]
  %v2054 = vld [vmem:[%s3 + $0x58] sm:$0xff]
  %v2055 = vld [vmem:[%s3 + $0x60] sm:$0xff]
  %v2056 = vld [vmem:[%s3 + $0x68] sm:$0xff]
  %v2057 = vld [vmem:[%s3 + $0x70] sm:$0xff]
  %v2058 = vld [vmem:[%s3 + $0x78] sm:$0xff]
  %v2059 = vld [vmem:[%s3 + $0x80] sm:$0xff]
  %v2060 = vld [vmem:[%s3 + $0x88] sm:$0xff]
  %v2061 = vld [vmem:[%s3 + $0x90] sm:$0xff]
  %v2062 = vld [vmem:[%s3 + $0x98] sm:$0xff]
  %v2063 = vld [vmem:[%s3 + $0xa0] sm:$0xff]
  %v2064 = vld [vmem:[%s3 + $0xa8] sm:$0xff]
  %v2065 = vld [vmem:[%s3 + $0xb0] sm:$0xff]
  %v2066 = vld [vmem:[%s3 + $0xb8] sm:$0xff]
  %v2067 = vld [vmem:[%s3 + $0xc0] sm:$0xff]
  %v2068 = vld [vmem:[%s3 + $0xc8] sm:$0xff]
  %v2069 = vld [vmem:[%s3 + $0xd0] sm:$0xff]
  %v2070 = vld [vmem:[%s3 + $0xd8] sm:$0xff]
  %v2071 = vld [vmem:[%s3 + $0xe0] sm:$0xff]
  %v2072 = vld [vmem:[%s3 + $0xe8] sm:$0xff]
  %v2073 = vld [vmem:[%s3 + $0xf0] sm:$0xff]
  %v2074 = vld [vmem:[%s3 + $0xf8] sm:$0xff]
  %v2075 = vld [vmem:[%s3 + $0x100] sm:$0xff]
  %v2076 = vld [vmem:[%s3 + $0x108] sm:$0xff]
  %v2077 = vld [vmem:[%s3 + $0x110] sm:$0xff]
  %v2078 = vld [vmem:[%s3 + $0x118] sm:$0xff]
  %v2079 = vld [vmem:[%s3 + $0x120] sm:$0xff]
  %v2080 = vld [vmem:[%s3 + $0x128] sm:$0xff]
  %v2081 = vld [vmem:[%s3 + $0x130] sm:$0xff]
  %v2082 = vld [vmem:[%s3 + $0x138] sm:$0xff]
  %v2083 = vld [vmem:[%s3 + $0x140] sm:$0xff]
  %v2084 = vld [vmem:[%s3 + $0x148] sm:$0xff]
  %v2085 = vld [vmem:[%s3 + $0x150] sm:$0xff]
  %v2086 = vld [vmem:[%s3 + $0x158] sm:$0xff]
  %v2087 = vld [vmem:[%s3 + $0x160] sm:$0xff]
  %v2088 = vld [vmem:[%s3 + $0x168] sm:$0xff]
  %v2089 = vld [vmem:[%s3 + $0x170] sm:$0xff]
  %v2090 = vld [vmem:[%s3 + $0x178] sm:$0xff]
  %v2091 = vld [vmem:[%s3 + $0x180] sm:$0xff]
  %v2092 = vld [vmem:[%s3 + $0x188] sm:$0xff]
  %v2093 = vld [vmem:[%s3 + $0x190] sm:$0xff]
  %v2094 = vld [vmem:[%s3 + $0x198] sm:$0xff]
  %v2095 = vld [vmem:[%s3 + $0x1a0] sm:$0xff]
  %v2096 = vld [vmem:[%s3 + $0x1a8] sm:$0xff]
  %v2097 = vld [vmem:[%s3 + $0x1b0] sm:$0xff]
  %v2098 = vld [vmem:[%s3 + $0x1b8] sm:$0xff]
  %v2099 = vld [vmem:[%s3 + $0x1c0] sm:$0xff]
  %v2100 = vld [vmem:[%s3 + $0x1c8] sm:$0xff]
  %v2101 = vld [vmem:[%s3 + $0x1d0] sm:$0xff]
  %v2102 = vld [vmem:[%s3 + $0x1d8] sm:$0xff]
  %v2103 = vld [vmem:[%s3 + $0x1e0] sm:$0xff]
  %v2104 = vld [vmem:[%s3 + $0x1e8] sm:$0xff]
  %v2105 = vld [vmem:[%s3 + $0x1f0] sm:$0xff]
  %v2106 = vld [vmem:[%s3 + $0x1f8] sm:$0xff]
  %2107 = vmatprep.subr.mxu0 0.0
  %2108 = vmatpush1.msra.mxu0 %v2058
  %2109 = vmatprep.subr.mxu0 0.0
  %2110 = vmatpush1.msra.mxu0 %v2057
  %2111 = vmatprep.subr.mxu0 0.0
  %2112 = vmatpush1.msra.mxu0 %v2056
  %2113 = vmatprep.subr.mxu0 0.0
  %2114 = vmatpush1.msra.mxu0 %v2055
  %2115 = vmatprep.subr.mxu0 0.0
  %2116 = vmatpush1.msra.mxu0 %v2054
  %2117 = vmatprep.subr.mxu0 0.0
  %2118 = vmatpush1.msra.mxu0 %v2053
  %2119 = vmatprep.subr.mxu0 0.0
  %2120 = vmatpush1.msra.mxu0 %v2052
  %2121 = vmatprep.subr.mxu0 0.0
  %2122 = vmatpush1.msra.mxu0 %v2051
  %2123 = vmatprep.subr.mxu0 0.0
  %2124 = vmatpush1.msra.mxu0 %v2050
  %2125 = vmatprep.subr.mxu0 0.0
  %2126 = vmatpush1.msra.mxu0 %v2049
  %2127 = vmatprep.subr.mxu0 0.0
  %2128 = vmatpush1.msra.mxu0 %v2048
  %2129 = vmatprep.subr.mxu0 0.0
  %2130 = vmatpush1.msra.mxu0 %v2047
  %2131 = vmatprep.subr.mxu0 0.0
  %2132 = vmatpush1.msra.mxu0 %v2046
  %2133 = vmatprep.subr.mxu0 0.0
  %2134 = vmatpush1.msra.mxu0 %v2045
  %2135 = vmatprep.subr.mxu0 0.0
  %2136 = vmatpush1.msra.mxu0 %v2044
  %2137 = vmatprep.subr.mxu0 0.0
  %2138 = vmatpush1.msra.mxu0 %v2043
  %2139 = vmatprep.subr.mxu0 0.0
  %2140 = vmatpush2.msra.mxu0 %v2074
  %2141 = vmatprep.subr.mxu0 0.0
  %2142 = vmatpush2.msra.mxu0 %v2073
  %2143 = vmatprep.subr.mxu0 0.0
  %2144 = vmatpush2.msra.mxu0 %v2072
  %2145 = vmatprep.subr.mxu0 0.0
  %2146 = vmatpush2.msra.mxu0 %v2071
  %2147 = vmatprep.subr.mxu0 0.0
  %2148 = vmatpush2.msra.mxu0 %v2070
  %2149 = vmatprep.subr.mxu0 0.0
  %2150 = vmatpush2.msra.mxu0 %v2069
  %2151 = vmatprep.subr.mxu0 0.0
  %2152 = vmatpush2.msra.mxu0 %v2068
  %2153 = vmatprep.subr.mxu0 0.0
  %2154 = vmatpush2.msra.mxu0 %v2067
  %2155 = vmatprep.subr.mxu0 0.0
  %2156 = vmatpush2.msra.mxu0 %v2066
  %2157 = vmatprep.subr.mxu0 0.0
  %2158 = vmatpush2.msra.mxu0 %v2065
  %2159 = vmatprep.subr.mxu0 0.0
  %2160 = vmatpush2.msra.mxu0 %v2064
  %2161 = vmatprep.subr.mxu0 0.0
  %2162 = vmatpush2.msra.mxu0 %v2063
  %2163 = vmatprep.subr.mxu0 0.0
  %2164 = vmatpush2.msra.mxu0 %v2062
  %2165 = vmatprep.subr.mxu0 0.0
  %2166 = vmatpush2.msra.mxu0 %v2061
  %2167 = vmatprep.subr.mxu0 0.0
  %2168 = vmatpush2.msra.mxu0 %v2060
  %2169 = vmatprep.subr.mxu0 0.0
  %2170 = vmatpush2.msra.mxu0 %v2059
  %2171 = vmatprep.mubr.f32.mxu0 %v2024
  %2172 = vmatmul.mubr.f32.gmra.mxu0 %v2023
  %v2173 = vpop.f32.mrf.mxu0
  %v2174 = vadd.f32 0.0, %v2173
  %v2175 = vpop.f32.mrf.mxu0
  %2176 = vmatprep.mubr.f32.mxu0 %v2028
  %2177 = vmatmul.mubr.f32.gmra.mxu0 %v2027
  %v2178 = vpop.f32.mrf.mxu0
  %v2179 = vadd.f32 0.0, %v2178
  %v2180 = vpop.f32.mrf.mxu0
  %2181 = vmatprep.mubr.f32.mxu0 %v2032
  %2182 = vmatmul.mubr.f32.gmra.mxu0 %v2031
  %v2183 = vpop.f32.mrf.mxu0
  %v2184 = vadd.f32 0.0, %v2183
  %v2185 = vpop.f32.mrf.mxu0
  %2186 = vmatprep.mubr.f32.mxu0 %v2036
  %2187 = vmatmul.mubr.f32.gmra.mxu0 %v2035
  %v2188 = vpop.f32.mrf.mxu0
  %v2189 = vadd.f32 0.0, %v2188
  %v2190 = vpop.f32.mrf.mxu0
  %2191 = vmatprep.mubr.f32.mxu0 %v2040
  %2192 = vmatmul.mubr.f32.gmra.mxu0 %v2039
  %v2193 = vpop.f32.mrf.mxu0
  %v2194 = vadd.f32 0.0, %v2193
  %v2195 = vpop.f32.mrf.mxu0
  %2196 = vdwg.mxu0
  %2197 = vmatprep.subr.mxu0 0.0
  %2198 = vmatpush1.msra.mxu0 %v2090
  %2199 = vmatprep.subr.mxu0 0.0
  %2200 = vmatpush1.msra.mxu0 %v2089
  %2201 = vmatprep.subr.mxu0 0.0
  %2202 = vmatpush1.msra.mxu0 %v2088
  %2203 = vmatprep.subr.mxu0 0.0
  %2204 = vmatpush1.msra.mxu0 %v2087
  %2205 = vmatprep.subr.mxu0 0.0
  %2206 = vmatpush1.msra.mxu0 %v2086
  %2207 = vmatprep.subr.mxu0 0.0
  %2208 = vmatpush1.msra.mxu0 %v2085
  %2209 = vmatprep.subr.mxu0 0.0
  %2210 = vmatpush1.msra.mxu0 %v2084
  %2211 = vmatprep.subr.mxu0 0.0
  %2212 = vmatpush1.msra.mxu0 %v2083
  %2213 = vmatprep.subr.mxu0 0.0
  %2214 = vmatpush1.msra.mxu0 %v2082
  %2215 = vmatprep.subr.mxu0 0.0
  %2216 = vmatpush1.msra.mxu0 %v2081
  %2217 = vmatprep.subr.mxu0 0.0
  %2218 = vmatpush1.msra.mxu0 %v2080
  %2219 = vmatprep.subr.mxu0 0.0
  %2220 = vmatpush1.msra.mxu0 %v2079
  %2221 = vmatprep.subr.mxu0 0.0
  %2222 = vmatpush1.msra.mxu0 %v2078
  %2223 = vmatprep.subr.mxu0 0.0
  %2224 = vmatpush1.msra.mxu0 %v2077
  %2225 = vmatprep.subr.mxu0 0.0
  %2226 = vmatpush1.msra.mxu0 %v2076
  %2227 = vmatprep.subr.mxu0 0.0
  %2228 = vmatpush1.msra.mxu0 %v2075
  %2229 = vmatprep.subr.mxu0 0.0
  %2230 = vmatpush2.msra.mxu0 %v2106
  %2231 = vmatprep.subr.mxu0 0.0
  %2232 = vmatpush2.msra.mxu0 %v2105
  %2233 = vmatprep.subr.mxu0 0.0
  %2234 = vmatpush2.msra.mxu0 %v2104
  %2235 = vmatprep.subr.mxu0 0.0
  %2236 = vmatpush2.msra.mxu0 %v2103
  %2237 = vmatprep.subr.mxu0 0.0
  %2238 = vmatpush2.msra.mxu0 %v2102
  %2239 = vmatprep.subr.mxu0 0.0
  %2240 = vmatpush2.msra.mxu0 %v2101
  %2241 = vmatprep.subr.mxu0 0.0
  %2242 = vmatpush2.msra.mxu0 %v2100
  %2243 = vmatprep.subr.mxu0 0.0
  %2244 = vmatpush2.msra.mxu0 %v2099
  %2245 = vmatprep.subr.mxu0 0.0
  %2246 = vmatpush2.msra.mxu0 %v2098
  %2247 = vmatprep.subr.mxu0 0.0
  %2248 = vmatpush2.msra.mxu0 %v2097
  %2249 = vmatprep.subr.mxu0 0.0
  %2250 = vmatpush2.msra.mxu0 %v2096
  %2251 = vmatprep.subr.mxu0 0.0
  %2252 = vmatpush2.msra.mxu0 %v2095
  %2253 = vmatprep.subr.mxu0 0.0
  %2254 = vmatpush2.msra.mxu0 %v2094
  %2255 = vmatprep.subr.mxu0 0.0
  %2256 = vmatpush2.msra.mxu0 %v2093
  %2257 = vmatprep.subr.mxu0 0.0
  %2258 = vmatpush2.msra.mxu0 %v2092
  %2259 = vmatprep.subr.mxu0 0.0
  %2260 = vmatpush2.msra.mxu0 %v2091
  %2261 = vmatprep.mubr.f32.mxu0 %v2026
  %2262 = vmatmul.mubr.f32.gmra.mxu0 %v2025
  %v2263 = vpop.f32.mrf.mxu0
  %v2264 = vadd.f32 %v2174, %v2263
  %v2265 = vpop.f32.mrf.mxu0
  %2266 = vmatprep.mubr.f32.mxu0 %v2030
  %2267 = vmatmul.mubr.f32.gmra.mxu0 %v2029
  %v2268 = vpop.f32.mrf.mxu0
  %v2269 = vadd.f32 %v2179, %v2268
  %v2270 = vpop.f32.mrf.mxu0
  %2271 = vmatprep.mubr.f32.mxu0 %v2034
  %2272 = vmatmul.mubr.f32.gmra.mxu0 %v2033
  %v2273 = vpop.f32.mrf.mxu0
  %v2274 = vadd.f32 %v2184, %v2273
  %v2275 = vpop.f32.mrf.mxu0
  %2276 = vmatprep.mubr.f32.mxu0 %v2038
  %2277 = vmatmul.mubr.f32.gmra.mxu0 %v2037
  %v2278 = vpop.f32.mrf.mxu0
  %v2279 = vadd.f32 %v2189, %v2278
  %v2280 = vpop.f32.mrf.mxu0
  %2281 = vmatprep.mubr.f32.mxu0 %v2042
  %2282 = vmatmul.mubr.f32.gmra.mxu0 %v2041
  %v2283 = vpop.f32.mrf.mxu0
  %v2284 = vadd.f32 %v2194, %v2283
  %v2285 = vpop.f32.mrf.mxu0
  %2286 = vdwg.mxu0
  %2287 = vset.pattern.permute.xlu0 114
  %2288 = vperm.xlu0 %2287, %v25
  %v2289 = vpop.permute.xlu0 %2288
  %2291 = vset.pattern.permute.xlu0 114
  %2292 = vperm.xlu0 %2291, %v26
  %v2293 = vpop.permute.xlu0 %2292
  %2295 = vset.pattern.permute.xlu0 114
  %2296 = vperm.xlu0 %2295, %v27
  %v2297 = vpop.permute.xlu0 %2296
  %2299 = vset.pattern.permute.xlu0 114
  %2300 = vperm.xlu0 %2299, %v28
  %v2301 = vpop.permute.xlu0 %2300
  %2303 = vset.pattern.permute.xlu0 114
  %2304 = vperm.xlu0 %2303, %v29
  %v2305 = vpop.permute.xlu0 %2304
  %vm2307 = vcmask 326656
  %v2308 = vsel %vm2307, %v25, 0
  %v2310 = vsel %vm2307, %v26, 0
  %v2312 = vsel %vm2307, %v27, 0
  %v2314 = vsel %vm2307, %v28, 0
  %v2316 = vsel %vm2307, %v29, 0
  %2318 = vmatprep.subr.mxu0 0.0
  %2319 = vmatpush1.msra.mxu0 0.0
  %2320 = vmatprep.subr.mxu0 0.0
  %2321 = vmatpush1.msra.mxu0 0.0
  %2322 = vmatprep.subr.mxu0 0.0
  %2323 = vmatpush1.msra.mxu0 0.0
  %2324 = vmatprep.subr.mxu0 0.0
  %2325 = vmatpush1.msra.mxu0 0.0
  %2326 = vmatprep.subr.mxu0 0.0
  %2327 = vmatpush1.msra.mxu0 0.0
  %2328 = vmatprep.subr.mxu0 0.0
  %2329 = vmatpush1.msra.mxu0 0.0
  %2330 = vmatprep.subr.mxu0 0.0
  %2331 = vmatpush1.msra.mxu0 0.0
  %2332 = vmatprep.subr.mxu0 0.0
  %2333 = vmatpush1.msra.mxu0 0.0
  %2334 = vmatprep.subr.mxu0 0.0
  %2335 = vmatpush1.msra.mxu0 0.0
  %2336 = vmatprep.subr.mxu0 0.0
  %2337 = vmatpush1.msra.mxu0 0.0
  %2338 = vmatprep.subr.mxu0 0.0
  %2339 = vmatpush1.msra.mxu0 0.0
  %2340 = vmatprep.subr.mxu0 0.0
  %2341 = vmatpush1.msra.mxu0 %v2284
  %2342 = vmatprep.subr.mxu0 0.0
  %2343 = vmatpush1.msra.mxu0 %v2279
  %2344 = vmatprep.subr.mxu0 0.0
  %2345 = vmatpush1.msra.mxu0 %v2274
  %2346 = vmatprep.subr.mxu0 0.0
  %2347 = vmatpush1.msra.mxu0 %v2269
  %2348 = vmatprep.subr.mxu0 0.0
  %2349 = vmatpush1.msra.mxu0 %v2264
  %2350 = vmatprep.subr.mxu0 0.0
  %2351 = vmatpush2.msra.mxu0 0.0
  %2352 = vmatprep.subr.mxu0 0.0
  %2353 = vmatpush2.msra.mxu0 0.0
  %2354 = vmatprep.subr.mxu0 0.0
  %2355 = vmatpush2.msra.mxu0 0.0
  %2356 = vmatprep.subr.mxu0 0.0
  %2357 = vmatpush2.msra.mxu0 0.0
  %2358 = vmatprep.subr.mxu0 0.0
  %2359 = vmatpush2.msra.mxu0 0.0
  %2360 = vmatprep.subr.mxu0 0.0
  %2361 = vmatpush2.msra.mxu0 0.0
  %2362 = vmatprep.subr.mxu0 0.0
  %2363 = vmatpush2.msra.mxu0 0.0
  %2364 = vmatprep.subr.mxu0 0.0
  %2365 = vmatpush2.msra.mxu0 0.0
  %2366 = vmatprep.subr.mxu0 0.0
  %2367 = vmatpush2.msra.mxu0 0.0
  %2368 = vmatprep.subr.mxu0 0.0
  %2369 = vmatpush2.msra.mxu0 0.0
  %2370 = vmatprep.subr.mxu0 0.0
  %2371 = vmatpush2.msra.mxu0 0.0
  %2372 = vmatprep.subr.mxu0 0.0
  %2373 = vmatpush2.msra.mxu0 0.0
  %2374 = vmatprep.subr.mxu0 0.0
  %2375 = vmatpush2.msra.mxu0 0.0
  %2376 = vmatprep.subr.mxu0 0.0
  %2377 = vmatpush2.msra.mxu0 0.0
  %2378 = vmatprep.subr.mxu0 0.0
  %2379 = vmatpush2.msra.mxu0 0.0
  %2380 = vmatprep.subr.mxu0 0.0
  %2381 = vmatpush2.msra.mxu0 0.0
  %2382 = vmatprep.mubr.f32.mxu0 0.0
  %2383 = vmatmul.mubr.f32.gmra.mxu0 %v2308
  %v2384 = vpop.f32.mrf.mxu0
  %v2385 = vadd.f32 %v2289, %v2384
  %v2386 = vpop.f32.mrf.mxu0
  %2387 = vmatprep.mubr.f32.mxu0 0.0
  %2388 = vmatmul.mubr.f32.gmra.mxu0 %v2310
  %v2389 = vpop.f32.mrf.mxu0
  %v2390 = vadd.f32 %v2293, %v2389
  %v2391 = vpop.f32.mrf.mxu0
  %2392 = vmatprep.mubr.f32.mxu0 0.0
  %2393 = vmatmul.mubr.f32.gmra.mxu0 %v2312
  %v2394 = vpop.f32.mrf.mxu0
  %v2395 = vadd.f32 %v2297, %v2394
  %v2396 = vpop.f32.mrf.mxu0
  %2397 = vmatprep.mubr.f32.mxu0 0.0
  %2398 = vmatmul.mubr.f32.gmra.mxu0 %v2314
  %v2399 = vpop.f32.mrf.mxu0
  %v2400 = vadd.f32 %v2301, %v2399
  %v2401 = vpop.f32.mrf.mxu0
  %2402 = vmatprep.mubr.f32.mxu0 0.0
  %2403 = vmatmul.mubr.f32.gmra.mxu0 %v2316
  %v2404 = vpop.f32.mrf.mxu0
  %v2405 = vadd.f32 %v2305, %v2404
  %v2406 = vpop.f32.mrf.mxu0
  %2407 = vdwg.mxu0
  %v2408 = vmax.f32 %v2385, 0.0
  %v2409 = vmax.f32 %v2390, 0.0
  %v2410 = vmax.f32 %v2395, 0.0
  %v2411 = vmax.f32 %v2400, 0.0
  %v2412 = vmax.f32 %v2405, 0.0
  %2413 = vset.pattern.permute.xlu0 115
  %2414 = vperm.xlu0 %2413, %v25
  %v2415 = vpop.permute.xlu0 %2414
  %2417 = vrot.lane.b32.xlu0 %v25, 88
  %v2418 = vpop.permute.xlu0 %2417
  %v2419 = vsel %vm2307, %v2418, 0
  %2421 = vmatprep.subr.mxu0 0.0
  %2422 = vmatpush1.msra.mxu0 0.0
  %2423 = vmatprep.subr.mxu0 0.0
  %2424 = vmatpush1.msra.mxu0 0.0
  %2425 = vmatprep.subr.mxu0 0.0
  %2426 = vmatpush1.msra.mxu0 0.0
  %2427 = vmatprep.subr.mxu0 0.0
  %2428 = vmatpush1.msra.mxu0 0.0
  %2429 = vmatprep.subr.mxu0 0.0
  %2430 = vmatpush1.msra.mxu0 0.0
  %2431 = vmatprep.subr.mxu0 0.0
  %2432 = vmatpush1.msra.mxu0 0.0
  %2433 = vmatprep.subr.mxu0 0.0
  %2434 = vmatpush1.msra.mxu0 0.0
  %2435 = vmatprep.subr.mxu0 0.0
  %2436 = vmatpush1.msra.mxu0 0.0
  %2437 = vmatprep.subr.mxu0 0.0
  %2438 = vmatpush1.msra.mxu0 0.0
  %2439 = vmatprep.subr.mxu0 0.0
  %2440 = vmatpush1.msra.mxu0 0.0
  %2441 = vmatprep.subr.mxu0 0.0
  %2442 = vmatpush1.msra.mxu0 0.0
  %2443 = vmatprep.subr.mxu0 0.0
  %2444 = vmatpush1.msra.mxu0 %v2412
  %2445 = vmatprep.subr.mxu0 0.0
  %2446 = vmatpush1.msra.mxu0 %v2411
  %2447 = vmatprep.subr.mxu0 0.0
  %2448 = vmatpush1.msra.mxu0 %v2410
  %2449 = vmatprep.subr.mxu0 0.0
  %2450 = vmatpush1.msra.mxu0 %v2409
  %2451 = vmatprep.subr.mxu0 0.0
  %2452 = vmatpush1.msra.mxu0 %v2408
  %2453 = vmatprep.subr.mxu0 0.0
  %2454 = vmatpush2.msra.mxu0 0.0
  %2455 = vmatprep.subr.mxu0 0.0
  %2456 = vmatpush2.msra.mxu0 0.0
  %2457 = vmatprep.subr.mxu0 0.0
  %2458 = vmatpush2.msra.mxu0 0.0
  %2459 = vmatprep.subr.mxu0 0.0
  %2460 = vmatpush2.msra.mxu0 0.0
  %2461 = vmatprep.subr.mxu0 0.0
  %2462 = vmatpush2.msra.mxu0 0.0
  %2463 = vmatprep.subr.mxu0 0.0
  %2464 = vmatpush2.msra.mxu0 0.0
  %2465 = vmatprep.subr.mxu0 0.0
  %2466 = vmatpush2.msra.mxu0 0.0
  %2467 = vmatprep.subr.mxu0 0.0
  %2468 = vmatpush2.msra.mxu0 0.0
  %2469 = vmatprep.subr.mxu0 0.0
  %2470 = vmatpush2.msra.mxu0 0.0
  %2471 = vmatprep.subr.mxu0 0.0
  %2472 = vmatpush2.msra.mxu0 0.0
  %2473 = vmatprep.subr.mxu0 0.0
  %2474 = vmatpush2.msra.mxu0 0.0
  %2475 = vmatprep.subr.mxu0 0.0
  %2476 = vmatpush2.msra.mxu0 0.0
  %2477 = vmatprep.subr.mxu0 0.0
  %2478 = vmatpush2.msra.mxu0 0.0
  %2479 = vmatprep.subr.mxu0 0.0
  %2480 = vmatpush2.msra.mxu0 0.0
  %2481 = vmatprep.subr.mxu0 0.0
  %2482 = vmatpush2.msra.mxu0 0.0
  %2483 = vmatprep.subr.mxu0 0.0
  %2484 = vmatpush2.msra.mxu0 0.0
  %2485 = vmatprep.mubr.f32.mxu0 0.0
  %2486 = vmatmul.mubr.f32.gmra.mxu0 %v2419
  %v2487 = vpop.f32.mrf.mxu0
  %v2488 = vadd.f32 %v2415, %v2487
  %v2489 = vpop.f32.mrf.mxu0
  %2490 = vdwg.mxu0
  %2491 = vrot.lane.b32.xlu0 %v25, 12
  %v2492 = vpop.permute.xlu0 %2491
  %v2495 = vsel %vm512, %v2488, 0
  %2497 = vmatprep.subr.mxu0 0.0
  %2498 = vmatpush1.msra.mxu0 0.0
  %2499 = vmatprep.subr.mxu0 0.0
  %2500 = vmatpush1.msra.mxu0 0.0
  %2501 = vmatprep.subr.mxu0 0.0
  %2502 = vmatpush1.msra.mxu0 0.0
  %2503 = vmatprep.subr.mxu0 0.0
  %2504 = vmatpush1.msra.mxu0 0.0
  %2505 = vmatprep.subr.mxu0 0.0
  %2506 = vmatpush1.msra.mxu0 0.0
  %2507 = vmatprep.subr.mxu0 0.0
  %2508 = vmatpush1.msra.mxu0 0.0
  %2509 = vmatprep.subr.mxu0 0.0
  %2510 = vmatpush1.msra.mxu0 0.0
  %2511 = vmatprep.subr.mxu0 0.0
  %2512 = vmatpush1.msra.mxu0 0.0
  %2513 = vmatprep.subr.mxu0 0.0
  %2514 = vmatpush1.msra.mxu0 0.0
  %2515 = vmatprep.subr.mxu0 0.0
  %2516 = vmatpush1.msra.mxu0 0.0
  %2517 = vmatprep.subr.mxu0 0.0
  %2518 = vmatpush1.msra.mxu0 0.0
  %2519 = vmatprep.subr.mxu0 0.0
  %2520 = vmatpush1.msra.mxu0 0.0
  %2521 = vmatprep.subr.mxu0 0.0
  %2522 = vmatpush1.msra.mxu0 0.0
  %2523 = vmatprep.subr.mxu0 0.0
  %2524 = vmatpush1.msra.mxu0 0.0
  %2525 = vmatprep.subr.mxu0 0.0
  %2526 = vmatpush1.msra.mxu0 0.0
  %2527 = vmatprep.subr.mxu0 0.0
  %2528 = vmatpush1.msra.mxu0 %v2492
  %2529 = vmatprep.subr.mxu0 0.0
  %2530 = vmatpush2.msra.mxu0 0.0
  %2531 = vmatprep.subr.mxu0 0.0
  %2532 = vmatpush2.msra.mxu0 0.0
  %2533 = vmatprep.subr.mxu0 0.0
  %2534 = vmatpush2.msra.mxu0 0.0
  %2535 = vmatprep.subr.mxu0 0.0
  %2536 = vmatpush2.msra.mxu0 0.0
  %2537 = vmatprep.subr.mxu0 0.0
  %2538 = vmatpush2.msra.mxu0 0.0
  %2539 = vmatprep.subr.mxu0 0.0
  %2540 = vmatpush2.msra.mxu0 0.0
  %2541 = vmatprep.subr.mxu0 0.0
  %2542 = vmatpush2.msra.mxu0 0.0
  %2543 = vmatprep.subr.mxu0 0.0
  %2544 = vmatpush2.msra.mxu0 0.0
  %2545 = vmatprep.subr.mxu0 0.0
  %2546 = vmatpush2.msra.mxu0 0.0
  %2547 = vmatprep.subr.mxu0 0.0
  %2548 = vmatpush2.msra.mxu0 0.0
  %2549 = vmatprep.subr.mxu0 0.0
  %2550 = vmatpush2.msra.mxu0 0.0
  %2551 = vmatprep.subr.mxu0 0.0
  %2552 = vmatpush2.msra.mxu0 0.0
  %2553 = vmatprep.subr.mxu0 0.0
  %2554 = vmatpush2.msra.mxu0 0.0
  %2555 = vmatprep.subr.mxu0 0.0
  %2556 = vmatpush2.msra.mxu0 0.0
  %2557 = vmatprep.subr.mxu0 0.0
  %2558 = vmatpush2.msra.mxu0 0.0
  %2559 = vmatprep.subr.mxu0 0.0
  %2560 = vmatpush2.msra.mxu0 0.0
  %2561 = vmatprep.mubr.f32.mxu0 0.0
  %2562 = vmatmul.mubr.f32.gmra.mxu0 %v2495
  %v2563 = vpop.f32.mrf.mxu0
  %v2564 = vadd.f32 0.0, %v2563
  %v2565 = vpop.f32.mrf.mxu0
  %2566 = vdwg.mxu0
  %vm2567 = vcmask 11264
  %2568 = vst.msk [vmem:[%s4] sm:$0xf] %vm2567, %v2564
  // Predicated region
  $region18: #{cnn_feature_extractor_forward.1} parent=0 // pred_check
    _
  $region19: #{cnn_feature_extractor_forward.1} parent=0 // pred_check_branch
    %2570 = sbr.rel (0) target = $region21
  $region20: #{cnn_feature_extractor_forward.1} parent=0 // pred_region
    _
  $region21: #{cnn_feature_extractor_forward.1} parent=0 // pred_fallthru
    _
  // Predicated region
  $region22: #{cnn_feature_extractor_forward.1} parent=0 // pred_check
    _
  $region23: #{cnn_feature_extractor_forward.1} parent=0 // pred_check_branch
    %2572 = sbr.rel (0) target = $region25
  $region24: #{cnn_feature_extractor_forward.1} parent=0 // pred_region
    _
  $region25: #{cnn_feature_extractor_forward.1} parent=0 // pred_fallthru
    _

</llo_original>
